<compile_context>
chip_gen: v6e
topology: v6e:2x2x1
jax: 0.10.0
libtpu: 0.0.40
codegen_flags: <defaults>
</compile_context>

<pallas_src>
import functools
import math

import jax
import jax.numpy as jnp
import numpy as np
from jax import lax
from jax.experimental import pallas as pl
from jax.experimental.pallas import tpu as pltpu


def _lrelu(x, slope=0.2):
    return jnp.where(x >= 0, x, slope * x)


# --------------------------------- the kernel --------------------------------

def decoder_kernel(num_res_layers, seq_len,
                   scal_ref, x_ref, w1_ref, b1_ref, rw1s_ref, rb1_ref,
                   rw2_ref, rb2_ref, w7_ref, o_ref):
    """Activations are (channels, columns); a column tile covers whole sequences
    (tile % seq_len == 0), so boundary masks are tile-local."""
    tile = x_ref.shape[-1]

    # ---- boundary masks computed in-kernel (cheap VPU filler, no mask DMA) ----
    lpos = lax.broadcasted_iota(jnp.int32, (1, tile), 1) % seq_len
    f32 = jnp.float32
    m_ge1 = (lpos >= 1).astype(f32)                 # has a valid left neighbor
    m_ge2 = (lpos >= 2).astype(f32)
    m_le1 = (lpos <= seq_len - 2).astype(f32)       # has a valid right neighbor
    m_le2 = (lpos <= seq_len - 3).astype(f32)
    m_first = (lpos == 0).astype(f32)
    m_last = (lpos == seq_len - 1).astype(f32)

    def shift(a, k, mask):
        # result[:, i] = a[:, i - k] within the same sequence, 0 across boundaries.
        return pltpu.roll(a, (k % tile), 1) * mask

    def mm(w, a):
        # MXU matmul; operands in the weight dtype (f32 or bf16), f32 accumulate.
        return jnp.dot(w, a.astype(w.dtype), preferred_element_type=jnp.float32)

    # ---- d_layer_one (Conv1d k=3 p=1) + LeakyReLU(0.2) ------------------------
    # Cin << H, so shifting the input (Cin rows) before the matmul is cheapest.
    x = x_ref[...]                                                  # (Cin, tile)
    h = mm(w1_ref[1], x)
    h = h + mm(w1_ref[0], shift(x, 1, m_ge1))
    h = h + mm(w1_ref[2], shift(x, -1, m_le1))
    h = _lrelu(h + b1_ref[...])                                     # (H, tile)

    # ---- ResidualStack: stacked-tap matmul, shift AFTER the matmul ------------
    rh = rb1_ref.shape[1]                                           # Rh

    def res_body(r, h):
        t = _lrelu(h)
        y = mm(rw1s_ref[r], t)                                      # (3*Rh, tile)
        t = (y[rh:2 * rh]
             + shift(y[:rh], 1, m_ge1)
             + shift(y[2 * rh:], -1, m_le1)
             + rb1_ref[r])
        t = _lrelu(t)
        t = mm(rw2_ref[r], t) + rb2_ref[r]                          # (H, tile)
        return h + t

    h = lax.fori_loop(0, num_res_layers, res_body, h, unroll=True)

    # ResidualStack's trailing LeakyReLU(0.2) + decoder's LeakyReLU(0.2) fuse
    # into a single slope 0.2 * 0.2 = 0.04 LeakyReLU.
    h = jnp.where(h >= 0, h, 0.04 * h)

    # ---- d_layer_two o d_layer_three fused: ONE (7, H) stacked matmul ---------
    # Rows 0..4: the composed 5-tap conv weights; rows 5/6: boundary corrections
    # for the zero-padded intermediate. Rolls/masks now touch (1, tile) rows.
    y = mm(w7_ref[...], h)                                          # (7, tile)
    b_all = scal_ref[0]
    sa = scal_ref[1]
    sb = scal_ref[2]
    z = (b_all
         + shift(y[0:1], 2, m_ge2)
         + shift(y[1:2], 1, m_ge1)
         + y[2:3]
         + shift(y[3:4], -1, m_le1)
         + shift(y[4:5], -2, m_le2)
         - m_first * (y[5:6] + sa)
         - m_last * (y[6:7] + sb))
    o_ref[...] = jnp.tanh(z)                                        # lane-dense store


# --------------------------- wrapper: layout plumbing -------------------------

def _choose_tile(seq_len, n_cols, target_cols):
    """Column tile: multiple of 128 (lane-dense) AND of L (sequence-aligned)."""
    base = (seq_len * 128) // math.gcd(seq_len, 128)
    n_needed = -(-n_cols // base)
    n_target = max(1, target_cols // base)
    return base * max(1, min(n_needed, n_target))


def _prepare_kernel_inputs(x_nlc, params, L, tile, mxu_dtype):
    """Transpose to the (channels, columns) kernel layout, stack residual conv
    taps, fuse d_layer_two/three into a 5-tap conv + corrections."""
    (w1, b1, rw1, rb1, rw2, rb2, w2, b2, w3, b3) = params
    N, L_, Cin = x_nlc.shape
    assert L_ == L and L >= 3, "kernel requires sequence length >= 3"
    M = N * L
    Mp = ((M + tile - 1) // tile) * tile

    # activations: (N, L, Cin) -> (Cin, N*L) -> zero-pad columns to Mp
    x_t = jnp.transpose(x_nlc, (2, 0, 1)).reshape(Cin, M)
    x_t = jnp.pad(x_t, ((0, 0), (0, Mp - M)))

    H = w1.shape[2]
    R, _, _, Rh = rw1.shape

    # weights transposed to (Cout, Cin) per tap; biases as (Cout, 1) columns
    w1_k = jnp.transpose(w1, (0, 2, 1)).astype(mxu_dtype)           # (3, H, Cin)
    b1_k = b1.reshape(H, 1).astype(jnp.float32)
    rw1s_k = (jnp.transpose(rw1, (0, 1, 3, 2))                       # (R, 3, Rh, H)
              .reshape(R, 3 * Rh, H).astype(mxu_dtype))              # stacked taps
    rb1_k = rb1.reshape(R, Rh, 1).astype(jnp.float32)
    rw2_k = jnp.transpose(rw2, (0, 2, 1)).astype(mxu_dtype)         # (R, H, Rh)
    rb2_k = rb2.reshape(R, H, 1).astype(jnp.float32)

    # compose w2/b2 (H -> H/2) with w3/b3 (H/2 -> 1) into one 5-tap conv, and
    # the two boundary-correction rows for the zero-padded intermediate.
    wc = []
    for u in range(5):
        acc = jnp.zeros((H, 1), jnp.float32)
        for t in range(3):
            s = u - t
            if 0 <= s <= 2:
                acc = acc + w2[t] @ w3[s]
        wc.append(acc.T)                                             # (1, H)
    corr0 = (w2[2] @ w3[0]).T                                        # subtract at pos == 0
    corr1 = (w2[0] @ w3[2]).T                                        # subtract at pos == L-1
    w7_k = jnp.concatenate(wc + [corr0, corr1], axis=0).astype(mxu_dtype)  # (7, H)

    b_all = b3[0, 0] + (b2 @ (w3[0] + w3[1] + w3[2]))[0, 0]
    sa = (b2 @ w3[0])[0, 0]
    sb = (b2 @ w3[2])[0, 0]
    scal = jnp.stack([b_all, sa, sb]).astype(jnp.float32)            # SMEM scalars

    kparams = (w1_k, b1_k, rw1s_k, rb1_k, rw2_k, rb2_k, w7_k)
    return x_t, scal, kparams, M, Mp


def decoder_forward(x_nlc, params, num_res_layers, *,
                    mxu_dtype=jnp.float32,
                    target_tile_cols=2048,
                    vmem_limit_bytes=48 * 1024 * 1024):
    """x_nlc: (N, L, Cin) f32 -> (N, L, 1) f32 (decoder output, channels-last).

    Perf notes: at realistic H use mxu_dtype=jnp.bfloat16 (f32 accumulation is
    kept in-kernel); shrink target_tile_cols on v7x (64 MiB VMEM, keep the
    parallel axis for both TensorCores), grow it on v5e (128 MiB VMEM).
    Default BlockSpec pipeline depth (2 buffers) is kept; sweep pl.Buffered(3)
    on v5e if DMA is exposed.
    """
    N, L, Cin = x_nlc.shape
    tile = _choose_tile(L, N * L, target_tile_cols)
    x_t, scal, kparams, M, Mp = _prepare_kernel_inputs(x_nlc, params, L, tile, mxu_dtype)

    def resident(a):
        nd = a.ndim
        return pl.BlockSpec(a.shape, lambda j, _nd=nd: (0,) * _nd)

    in_specs = ([pl.BlockSpec(memory_space=pltpu.MemorySpace.SMEM),   # bias scalars
                 pl.BlockSpec((Cin, tile), lambda j: (0, j))]          # activations
                + [resident(a) for a in kparams])                     # weights stay resident
    out_specs = pl.BlockSpec((1, tile), lambda j: (0, j))

    kernel = functools.partial(decoder_kernel, num_res_layers, L)
    out_pad = pl.pallas_call(
        kernel,
        out_shape=jax.ShapeDtypeStruct((1, Mp), jnp.float32),
        grid_spec=pltpu.PrefetchScalarGridSpec(
            num_scalar_prefetch=0,
            grid=(Mp // tile,),
            in_specs=in_specs,
            out_specs=out_specs),
        compiler_params=pltpu.CompilerParams(
            dimension_semantics=("parallel",),
            vmem_limit_bytes=vmem_limit_bytes),
    )(scal, x_t, *kparams)

    return out_pad[:, :M].reshape(N, L, 1)


# ------------------------- deterministic parameter init ----------------------

def init_params(key, in_channels, hidden_dim, num_residual_layers, residual_hidden_dim):
    ks = jax.random.split(key, 10)

    def rnd(k, shape, fan_in):
        return jax.random.normal(k, shape, jnp.float32) / jnp.sqrt(float(fan_in))

    w1 = rnd(ks[0], (3, in_channels, hidden_dim), 3 * in_channels)
    b1 = rnd(ks[1], (1, hidden_dim), 3 * in_channels)
    rw1 = rnd(ks[2], (num_residual_layers, 3, hidden_dim, residual_hidden_dim), 3 * hidden_dim)
    rb1 = rnd(ks[3], (num_residual_layers, residual_hidden_dim), 3 * hidden_dim)
    rw2 = rnd(ks[4], (num_residual_layers, residual_hidden_dim, hidden_dim), residual_hidden_dim)
    rb2 = rnd(ks[5], (num_residual_layers, hidden_dim), residual_hidden_dim)
    w2 = rnd(ks[6], (3, hidden_dim, hidden_dim // 2), 3 * hidden_dim)
    b2 = rnd(ks[7], (1, hidden_dim // 2), 3 * hidden_dim)
    w3 = rnd(ks[8], (3, hidden_dim // 2, 1), 3 * (hidden_dim // 2))
    b3 = rnd(ks[9], (1, 1), 3 * (hidden_dim // 2))
    return (w1, b1, rw1, rb1, rw2, rb2, w2, b2, w3, b3)


# ------------------------------ pure-JAX reference ----------------------------

def _conv3_ref(x, w, b):
    y = jax.lax.conv_general_dilated(
        x, w, window_strides=(1,), padding=[(1, 1)],
        dimension_numbers=('NWC', 'WIO', 'NWC'))
    return y + b


def decoder_ref(x, params, num_res_layers):
    (w1, b1, rw1, rb1, rw2, rb2, w2, b2, w3, b3) = params
    lrelu = lambda v: jnp.where(v >= 0, v, 0.2 * v)
    h = lrelu(_conv3_ref(x, w1, b1))
    for r in range(num_res_layers):
        t = lrelu(h)
        t = lrelu(_conv3_ref(t, rw1[r], rb1[r:r + 1]))
        t = jnp.einsum('nlc,cd->nld', t, rw2[r]) + rb2[r:r + 1]
        h = h + t
    h = lrelu(lrelu(h))
    h = _conv3_ref(h, w2, b2)
    h = _conv3_ref(h, w3, b3)
    return jnp.tanh(h)


# ----------------------------------- main -------------------------------------

if __name__ == "__main__":
    key = jax.random.PRNGKey(0)
    kx, kp = jax.random.split(key)

    N, Cin, L = 2, 4, 16           # PyTorch input would be (N, Cin, L)
    H, R, Rh = 32, 2, 8            # hidden_dim, num_residual_layers, residual_hidden_dim

    x_ncl = jax.random.normal(kx, (N, Cin, L), jnp.float32)   # PyTorch NCL layout
    x = jnp.transpose(x_ncl, (0, 2, 1))                       # (N, L, C) channels-last

    params = init_params(kp, Cin, H, R, Rh)
    ref = decoder_ref(x, params, R)

    # f32 MXU path: tight check against the f32 reference.
    out = jax.block_until_ready(decoder_forward(x, params, R))
    assert out.shape == (N, L, 1)
    np.testing.assert_allclose(np.asarray(out), np.asarray(ref), rtol=1e-4, atol=1e-5)

    # bf16 MXU-operand path (what you'd run at realistic H): loose tolerance.
    out_bf16 = jax.block_until_ready(
        decoder_forward(x, params, R, mxu_dtype=jnp.bfloat16))
    np.testing.assert_allclose(np.asarray(out_bf16), np.asarray(ref), rtol=8e-2, atol=8e-2)

    # Exact lane-multiple column count (M == 128): roll wrap-around must stay
    # fully mask-guarded even with zero pad columns absent.
    N2 = 8
    x2 = jax.random.normal(jax.random.PRNGKey(1), (N2, L, Cin), jnp.float32)
    out2 = jax.block_until_ready(decoder_forward(x2, params, R))
    np.testing.assert_allclose(np.asarray(out2), np.asarray(decoder_ref(x2, params, R)),
                               rtol=1e-4, atol=1e-5)

    print("KERNEL_OK")
</pallas_src>

<mosaic_0001>
module attributes {stable_mosaic.version = 11 : i64} {
  func.func @decoder_kernel(%arg0: i32, %arg1: memref<3xf32, #tpu.memory_space<smem>>, %arg2: memref<4x128xf32, #tpu.memory_space<vmem>>, %arg3: memref<3x32x4xf32, #tpu.memory_space<vmem>>, %arg4: memref<32x1xf32, #tpu.memory_space<vmem>>, %arg5: memref<2x24x32xf32, #tpu.memory_space<vmem>>, %arg6: memref<2x8x1xf32, #tpu.memory_space<vmem>>, %arg7: memref<2x32x8xf32, #tpu.memory_space<vmem>>, %arg8: memref<2x32x1xf32, #tpu.memory_space<vmem>>, %arg9: memref<7x32xf32, #tpu.memory_space<vmem>>, %arg10: memref<1x128xf32, #tpu.memory_space<vmem>>) attributes {dimension_semantics = [#tpu.dimension_semantics<parallel>], iteration_bounds = array<i64: 1>, scalar_prefetch = 0 : i64, scratch_operands = 0 : i64, tpu.core_type = #tpu.core_type<tc>, window_params = [{transform_indices = @transform_0, window_bounds = array<i64: 3>}, {transform_indices = @transform_1, window_bounds = array<i64: 4, 128>}, {pipeline_mode = #tpu.pipeline_mode<synchronous>, transform_indices = @transform_2, window_bounds = array<i64: 3, 32, 4>}, {pipeline_mode = #tpu.pipeline_mode<synchronous>, transform_indices = @transform_3, window_bounds = array<i64: 32, 1>}, {pipeline_mode = #tpu.pipeline_mode<synchronous>, transform_indices = @transform_4, window_bounds = array<i64: 2, 24, 32>}, {pipeline_mode = #tpu.pipeline_mode<synchronous>, transform_indices = @transform_5, window_bounds = array<i64: 2, 8, 1>}, {pipeline_mode = #tpu.pipeline_mode<synchronous>, transform_indices = @transform_6, window_bounds = array<i64: 2, 32, 8>}, {pipeline_mode = #tpu.pipeline_mode<synchronous>, transform_indices = @transform_7, window_bounds = array<i64: 2, 32, 1>}, {pipeline_mode = #tpu.pipeline_mode<synchronous>, transform_indices = @transform_8, window_bounds = array<i64: 7, 32>}, {transform_indices = @transform_9, window_bounds = array<i64: 1, 128>}]} {
    %0 = tpu.iota {dimensions = array<i32: 1>} : vector<1x128xi32>
    %c16_i32 = arith.constant 16 : i32
    %c0_i32 = arith.constant 0 : i32
    %1 = arith.cmpi eq, %c16_i32, %c0_i32 : i32
    %c1_i32 = arith.constant 1 : i32
    %2 = arith.select %1, %c1_i32, %c16_i32 : i32
    %3 = vector.broadcast %2 : i32 to vector<1x128xi32>
    %4 = arith.remsi %0, %3 : vector<1x128xi32>
    %c0_i32_0 = arith.constant 0 : i32
    %5 = vector.broadcast %c0_i32_0 : i32 to vector<1x128xi32>
    %6 = arith.cmpi ne, %4, %5 : vector<1x128xi32>
    %c0_i32_1 = arith.constant 0 : i32
    %7 = vector.broadcast %c0_i32_1 : i32 to vector<1x128xi32>
    %8 = arith.cmpi slt, %4, %7 : vector<1x128xi32>
    %c0_i32_2 = arith.constant 0 : i32
    %9 = arith.cmpi slt, %2, %c0_i32_2 : i32
    %10 = vector.broadcast %9 : i1 to vector<1x128xi1>
    %11 = vector.broadcast %10 : vector<1x128xi1> to vector<1x128xi1>
    %12 = arith.xori %8, %11 : vector<1x128xi1>
    %13 = arith.andi %12, %6 : vector<1x128xi1>
    %14 = vector.broadcast %2 : i32 to vector<1x128xi32>
    %15 = arith.addi %4, %14 : vector<1x128xi32>
    %16 = arith.select %13, %15, %4 : vector<1x128xi1>, vector<1x128xi32>
    %c1_i32_3 = arith.constant 1 : i32
    %17 = vector.broadcast %c1_i32_3 : i32 to vector<1x128xi32>
    %18 = arith.cmpi sge, %16, %17 : vector<1x128xi32>
    %19 = arith.extui %18 : vector<1x128xi1> to vector<1x128xi32>
    %20 = arith.sitofp %19 : vector<1x128xi32> to vector<1x128xf32>
    %c2_i32 = arith.constant 2 : i32
    %21 = vector.broadcast %c2_i32 : i32 to vector<1x128xi32>
    %22 = arith.cmpi sge, %16, %21 : vector<1x128xi32>
    %23 = arith.extui %22 : vector<1x128xi1> to vector<1x128xi32>
    %24 = arith.sitofp %23 : vector<1x128xi32> to vector<1x128xf32>
    %c14_i32 = arith.constant 14 : i32
    %25 = vector.broadcast %c14_i32 : i32 to vector<1x128xi32>
    %26 = arith.cmpi sle, %16, %25 : vector<1x128xi32>
    %27 = arith.extui %26 : vector<1x128xi1> to vector<1x128xi32>
    %28 = arith.sitofp %27 : vector<1x128xi32> to vector<1x128xf32>
    %c13_i32 = arith.constant 13 : i32
    %29 = vector.broadcast %c13_i32 : i32 to vector<1x128xi32>
    %30 = arith.cmpi sle, %16, %29 : vector<1x128xi32>
    %31 = arith.extui %30 : vector<1x128xi1> to vector<1x128xi32>
    %32 = arith.sitofp %31 : vector<1x128xi32> to vector<1x128xf32>
    %c0_i32_4 = arith.constant 0 : i32
    %33 = vector.broadcast %c0_i32_4 : i32 to vector<1x128xi32>
    %34 = arith.cmpi eq, %16, %33 : vector<1x128xi32>
    %35 = arith.extui %34 : vector<1x128xi1> to vector<1x128xi32>
    %36 = arith.sitofp %35 : vector<1x128xi32> to vector<1x128xf32>
    %c15_i32 = arith.constant 15 : i32
    %37 = vector.broadcast %c15_i32 : i32 to vector<1x128xi32>
    %38 = arith.cmpi eq, %16, %37 : vector<1x128xi32>
    %39 = arith.extui %38 : vector<1x128xi1> to vector<1x128xi32>
    %40 = arith.sitofp %39 : vector<1x128xi32> to vector<1x128xf32>
    %c0 = arith.constant 0 : index
    %c0_5 = arith.constant 0 : index
    %41 = vector.load %arg2[%c0, %c0_5] : memref<4x128xf32, #tpu.memory_space<vmem>>, vector<4x128xf32>
    %c1 = arith.constant 1 : index
    %c0_6 = arith.constant 0 : index
    %c0_7 = arith.constant 0 : index
    %42 = vector.load %arg3[%c1, %c0_6, %c0_7] : memref<3x32x4xf32, #tpu.memory_space<vmem>>, vector<1x32x4xf32>
    %43 = vector.shape_cast %42 : vector<1x32x4xf32> to vector<32x4xf32>
    %cst = arith.constant dense<0.000000e+00> : vector<32x128xf32>
    %44 = tpu.matmul %43, %41, %cst {dimension_numbers = #tpu.dot_dimension_numbers<[1], [0], [0], [1], [0, 0, 1, 1], [], []>} : vector<32x4xf32>, vector<4x128xf32>, vector<32x128xf32> -> vector<32x128xf32>
    %c0_8 = arith.constant 0 : index
    %c0_9 = arith.constant 0 : index
    %c0_10 = arith.constant 0 : index
    %45 = vector.load %arg3[%c0_8, %c0_9, %c0_10] : memref<3x32x4xf32, #tpu.memory_space<vmem>>, vector<1x32x4xf32>
    %46 = vector.shape_cast %45 : vector<1x32x4xf32> to vector<32x4xf32>
    %c1_i32_11 = arith.constant 1 : i32
    %47 = tpu.dynamic_rotate %41 by %c1_i32_11 dim 1 : vector<4x128xf32>, i32 -> vector<4x128xf32>
    %48 = vector.broadcast %20 : vector<1x128xf32> to vector<4x128xf32>
    %49 = arith.mulf %47, %48 : vector<4x128xf32>
    %cst_12 = arith.constant dense<0.000000e+00> : vector<32x128xf32>
    %50 = tpu.matmul %46, %49, %cst_12 {dimension_numbers = #tpu.dot_dimension_numbers<[1], [0], [0], [1], [0, 0, 1, 1], [], []>} : vector<32x4xf32>, vector<4x128xf32>, vector<32x128xf32> -> vector<32x128xf32>
    %51 = arith.addf %44, %50 : vector<32x128xf32>
    %c2 = arith.constant 2 : index
    %c0_13 = arith.constant 0 : index
    %c0_14 = arith.constant 0 : index
    %52 = vector.load %arg3[%c2, %c0_13, %c0_14] : memref<3x32x4xf32, #tpu.memory_space<vmem>>, vector<1x32x4xf32>
    %53 = vector.shape_cast %52 : vector<1x32x4xf32> to vector<32x4xf32>
    %c127_i32 = arith.constant 127 : i32
    %54 = tpu.dynamic_rotate %41 by %c127_i32 dim 1 : vector<4x128xf32>, i32 -> vector<4x128xf32>
    %55 = vector.broadcast %28 : vector<1x128xf32> to vector<4x128xf32>
    %56 = arith.mulf %54, %55 : vector<4x128xf32>
    %cst_15 = arith.constant dense<0.000000e+00> : vector<32x128xf32>
    %57 = tpu.matmul %53, %56, %cst_15 {dimension_numbers = #tpu.dot_dimension_numbers<[1], [0], [0], [1], [0, 0, 1, 1], [], []>} : vector<32x4xf32>, vector<4x128xf32>, vector<32x128xf32> -> vector<32x128xf32>
    %58 = arith.addf %51, %57 : vector<32x128xf32>
    %c0_16 = arith.constant 0 : index
    %c0_17 = arith.constant 0 : index
    %59 = vector.load %arg4[%c0_16, %c0_17] : memref<32x1xf32, #tpu.memory_space<vmem>>, vector<32x1xf32>
    %60 = vector.broadcast %59 : vector<32x1xf32> to vector<32x128xf32>
    %61 = arith.addf %58, %60 : vector<32x128xf32>
    %cst_18 = arith.constant 0.000000e+00 : f32
    %62 = vector.broadcast %cst_18 : f32 to vector<32x128xf32>
    %63 = arith.cmpf oge, %61, %62 : vector<32x128xf32>
    %cst_19 = arith.constant 2.000000e-01 : f32
    %64 = vector.broadcast %cst_19 : f32 to vector<32x128xf32>
    %65 = arith.mulf %64, %61 : vector<32x128xf32>
    %66 = arith.select %63, %61, %65 : vector<32x128xi1>, vector<32x128xf32>
    %c0_i32_20 = arith.constant 0 : i32
    %cst_21 = arith.constant 0.000000e+00 : f32
    %67 = vector.broadcast %cst_21 : f32 to vector<32x128xf32>
    %68 = arith.cmpf oge, %66, %67 : vector<32x128xf32>
    %cst_22 = arith.constant 2.000000e-01 : f32
    %69 = vector.broadcast %cst_22 : f32 to vector<32x128xf32>
    %70 = arith.mulf %69, %66 : vector<32x128xf32>
    %71 = arith.select %68, %66, %70 : vector<32x128xi1>, vector<32x128xf32>
    %72 = arith.index_cast %c0_i32_20 : i32 to index
    %c0_23 = arith.constant 0 : index
    %c0_24 = arith.constant 0 : index
    %73 = vector.load %arg5[%72, %c0_23, %c0_24] : memref<2x24x32xf32, #tpu.memory_space<vmem>>, vector<1x24x32xf32>
    %74 = vector.shape_cast %73 : vector<1x24x32xf32> to vector<24x32xf32>
    %cst_25 = arith.constant dense<0.000000e+00> : vector<24x128xf32>
    %75 = tpu.matmul %74, %71, %cst_25 {dimension_numbers = #tpu.dot_dimension_numbers<[1], [0], [0], [1], [0, 0, 1, 1], [], []>} : vector<24x32xf32>, vector<32x128xf32>, vector<24x128xf32> -> vector<24x128xf32>
    %76 = vector.extract_strided_slice %75 {offsets = [8, 0], sizes = [8, 128], strides = [1, 1]} : vector<24x128xf32> to vector<8x128xf32>
    %77 = vector.extract_strided_slice %75 {offsets = [0, 0], sizes = [8, 128], strides = [1, 1]} : vector<24x128xf32> to vector<8x128xf32>
    %c1_i32_26 = arith.constant 1 : i32
    %78 = tpu.dynamic_rotate %77 by %c1_i32_26 dim 1 : vector<8x128xf32>, i32 -> vector<8x128xf32>
    %79 = vector.broadcast %20 : vector<1x128xf32> to vector<8x128xf32>
    %80 = arith.mulf %78, %79 : vector<8x128xf32>
    %81 = arith.addf %76, %80 : vector<8x128xf32>
    %82 = vector.extract_strided_slice %75 {offsets = [16, 0], sizes = [8, 128], strides = [1, 1]} : vector<24x128xf32> to vector<8x128xf32>
    %c127_i32_27 = arith.constant 127 : i32
    %83 = tpu.dynamic_rotate %82 by %c127_i32_27 dim 1 : vector<8x128xf32>, i32 -> vector<8x128xf32>
    %84 = vector.broadcast %28 : vector<1x128xf32> to vector<8x128xf32>
    %85 = arith.mulf %83, %84 : vector<8x128xf32>
    %86 = arith.addf %81, %85 : vector<8x128xf32>
    %87 = arith.index_cast %c0_i32_20 : i32 to index
    %c0_28 = arith.constant 0 : index
    %c0_29 = arith.constant 0 : index
    %88 = vector.load %arg6[%87, %c0_28, %c0_29] : memref<2x8x1xf32, #tpu.memory_space<vmem>>, vector<1x8x1xf32>
    %89 = vector.shape_cast %88 : vector<1x8x1xf32> to vector<8x1xf32>
    %90 = vector.broadcast %89 : vector<8x1xf32> to vector<8x128xf32>
    %91 = arith.addf %86, %90 : vector<8x128xf32>
    %cst_30 = arith.constant 0.000000e+00 : f32
    %92 = vector.broadcast %cst_30 : f32 to vector<8x128xf32>
    %93 = arith.cmpf oge, %91, %92 : vector<8x128xf32>
    %cst_31 = arith.constant 2.000000e-01 : f32
    %94 = vector.broadcast %cst_31 : f32 to vector<8x128xf32>
    %95 = arith.mulf %94, %91 : vector<8x128xf32>
    %96 = arith.select %93, %91, %95 : vector<8x128xi1>, vector<8x128xf32>
    %97 = arith.index_cast %c0_i32_20 : i32 to index
    %c0_32 = arith.constant 0 : index
    %c0_33 = arith.constant 0 : index
    %98 = vector.load %arg7[%97, %c0_32, %c0_33] : memref<2x32x8xf32, #tpu.memory_space<vmem>>, vector<1x32x8xf32>
    %99 = vector.shape_cast %98 : vector<1x32x8xf32> to vector<32x8xf32>
    %cst_34 = arith.constant dense<0.000000e+00> : vector<32x128xf32>
    %100 = tpu.matmul %99, %96, %cst_34 {dimension_numbers = #tpu.dot_dimension_numbers<[1], [0], [0], [1], [0, 0, 1, 1], [], []>} : vector<32x8xf32>, vector<8x128xf32>, vector<32x128xf32> -> vector<32x128xf32>
    %101 = arith.index_cast %c0_i32_20 : i32 to index
    %c0_35 = arith.constant 0 : index
    %c0_36 = arith.constant 0 : index
    %102 = vector.load %arg8[%101, %c0_35, %c0_36] : memref<2x32x1xf32, #tpu.memory_space<vmem>>, vector<1x32x1xf32>
    %103 = vector.shape_cast %102 : vector<1x32x1xf32> to vector<32x1xf32>
    %104 = vector.broadcast %103 : vector<32x1xf32> to vector<32x128xf32>
    %105 = arith.addf %100, %104 : vector<32x128xf32>
    %106 = arith.addf %66, %105 : vector<32x128xf32>
    %c1_i32_37 = arith.constant 1 : i32
    %cst_38 = arith.constant 0.000000e+00 : f32
    %107 = vector.broadcast %cst_38 : f32 to vector<32x128xf32>
    %108 = arith.cmpf oge, %106, %107 : vector<32x128xf32>
    %cst_39 = arith.constant 2.000000e-01 : f32
    %109 = vector.broadcast %cst_39 : f32 to vector<32x128xf32>
    %110 = arith.mulf %109, %106 : vector<32x128xf32>
    %111 = arith.select %108, %106, %110 : vector<32x128xi1>, vector<32x128xf32>
    %112 = arith.index_cast %c1_i32_37 : i32 to index
    %c0_40 = arith.constant 0 : index
    %c0_41 = arith.constant 0 : index
    %113 = vector.load %arg5[%112, %c0_40, %c0_41] : memref<2x24x32xf32, #tpu.memory_space<vmem>>, vector<1x24x32xf32>
    %114 = vector.shape_cast %113 : vector<1x24x32xf32> to vector<24x32xf32>
    %cst_42 = arith.constant dense<0.000000e+00> : vector<24x128xf32>
    %115 = tpu.matmul %114, %111, %cst_42 {dimension_numbers = #tpu.dot_dimension_numbers<[1], [0], [0], [1], [0, 0, 1, 1], [], []>} : vector<24x32xf32>, vector<32x128xf32>, vector<24x128xf32> -> vector<24x128xf32>
    %116 = vector.extract_strided_slice %115 {offsets = [8, 0], sizes = [8, 128], strides = [1, 1]} : vector<24x128xf32> to vector<8x128xf32>
    %117 = vector.extract_strided_slice %115 {offsets = [0, 0], sizes = [8, 128], strides = [1, 1]} : vector<24x128xf32> to vector<8x128xf32>
    %c1_i32_43 = arith.constant 1 : i32
    %118 = tpu.dynamic_rotate %117 by %c1_i32_43 dim 1 : vector<8x128xf32>, i32 -> vector<8x128xf32>
    %119 = vector.broadcast %20 : vector<1x128xf32> to vector<8x128xf32>
    %120 = arith.mulf %118, %119 : vector<8x128xf32>
    %121 = arith.addf %116, %120 : vector<8x128xf32>
    %122 = vector.extract_strided_slice %115 {offsets = [16, 0], sizes = [8, 128], strides = [1, 1]} : vector<24x128xf32> to vector<8x128xf32>
    %c127_i32_44 = arith.constant 127 : i32
    %123 = tpu.dynamic_rotate %122 by %c127_i32_44 dim 1 : vector<8x128xf32>, i32 -> vector<8x128xf32>
    %124 = vector.broadcast %28 : vector<1x128xf32> to vector<8x128xf32>
    %125 = arith.mulf %123, %124 : vector<8x128xf32>
    %126 = arith.addf %121, %125 : vector<8x128xf32>
    %127 = arith.index_cast %c1_i32_37 : i32 to index
    %c0_45 = arith.constant 0 : index
    %c0_46 = arith.constant 0 : index
    %128 = vector.load %arg6[%127, %c0_45, %c0_46] : memref<2x8x1xf32, #tpu.memory_space<vmem>>, vector<1x8x1xf32>
    %129 = vector.shape_cast %128 : vector<1x8x1xf32> to vector<8x1xf32>
    %130 = vector.broadcast %129 : vector<8x1xf32> to vector<8x128xf32>
    %131 = arith.addf %126, %130 : vector<8x128xf32>
    %cst_47 = arith.constant 0.000000e+00 : f32
    %132 = vector.broadcast %cst_47 : f32 to vector<8x128xf32>
    %133 = arith.cmpf oge, %131, %132 : vector<8x128xf32>
    %cst_48 = arith.constant 2.000000e-01 : f32
    %134 = vector.broadcast %cst_48 : f32 to vector<8x128xf32>
    %135 = arith.mulf %134, %131 : vector<8x128xf32>
    %136 = arith.select %133, %131, %135 : vector<8x128xi1>, vector<8x128xf32>
    %137 = arith.index_cast %c1_i32_37 : i32 to index
    %c0_49 = arith.constant 0 : index
    %c0_50 = arith.constant 0 : index
    %138 = vector.load %arg7[%137, %c0_49, %c0_50] : memref<2x32x8xf32, #tpu.memory_space<vmem>>, vector<1x32x8xf32>
    %139 = vector.shape_cast %138 : vector<1x32x8xf32> to vector<32x8xf32>
    %cst_51 = arith.constant dense<0.000000e+00> : vector<32x128xf32>
    %140 = tpu.matmul %139, %136, %cst_51 {dimension_numbers = #tpu.dot_dimension_numbers<[1], [0], [0], [1], [0, 0, 1, 1], [], []>} : vector<32x8xf32>, vector<8x128xf32>, vector<32x128xf32> -> vector<32x128xf32>
    %141 = arith.index_cast %c1_i32_37 : i32 to index
    %c0_52 = arith.constant 0 : index
    %c0_53 = arith.constant 0 : index
    %142 = vector.load %arg8[%141, %c0_52, %c0_53] : memref<2x32x1xf32, #tpu.memory_space<vmem>>, vector<1x32x1xf32>
    %143 = vector.shape_cast %142 : vector<1x32x1xf32> to vector<32x1xf32>
    %144 = vector.broadcast %143 : vector<32x1xf32> to vector<32x128xf32>
    %145 = arith.addf %140, %144 : vector<32x128xf32>
    %146 = arith.addf %106, %145 : vector<32x128xf32>
    %c2_i32_54 = arith.constant 2 : i32
    %cst_55 = arith.constant 0.000000e+00 : f32
    %147 = vector.broadcast %cst_55 : f32 to vector<32x128xf32>
    %148 = arith.cmpf oge, %146, %147 : vector<32x128xf32>
    %cst_56 = arith.constant 4.000000e-02 : f32
    %149 = vector.broadcast %cst_56 : f32 to vector<32x128xf32>
    %150 = arith.mulf %149, %146 : vector<32x128xf32>
    %151 = arith.select %148, %146, %150 : vector<32x128xi1>, vector<32x128xf32>
    %c0_57 = arith.constant 0 : index
    %c0_58 = arith.constant 0 : index
    %152 = vector.load %arg9[%c0_57, %c0_58] : memref<7x32xf32, #tpu.memory_space<vmem>>, vector<7x32xf32>
    %cst_59 = arith.constant dense<0.000000e+00> : vector<7x128xf32>
    %153 = tpu.matmul %152, %151, %cst_59 {dimension_numbers = #tpu.dot_dimension_numbers<[1], [0], [0], [1], [0, 0, 1, 1], [], []>} : vector<7x32xf32>, vector<32x128xf32>, vector<7x128xf32> -> vector<7x128xf32>
    %c0_60 = arith.constant 0 : index
    %154 = memref.load %arg1[%c0_60] : memref<3xf32, #tpu.memory_space<smem>>
    %c1_61 = arith.constant 1 : index
    %155 = memref.load %arg1[%c1_61] : memref<3xf32, #tpu.memory_space<smem>>
    %c2_62 = arith.constant 2 : index
    %156 = memref.load %arg1[%c2_62] : memref<3xf32, #tpu.memory_space<smem>>
    %157 = vector.extract_strided_slice %153 {offsets = [0, 0], sizes = [1, 128], strides = [1, 1]} : vector<7x128xf32> to vector<1x128xf32>
    %c2_i32_63 = arith.constant 2 : i32
    %158 = tpu.dynamic_rotate %157 by %c2_i32_63 dim 1 : vector<1x128xf32>, i32 -> vector<1x128xf32>
    %159 = arith.mulf %158, %24 : vector<1x128xf32>
    %160 = vector.broadcast %154 : f32 to vector<1x128xf32>
    %161 = arith.addf %160, %159 : vector<1x128xf32>
    %162 = vector.extract_strided_slice %153 {offsets = [1, 0], sizes = [1, 128], strides = [1, 1]} : vector<7x128xf32> to vector<1x128xf32>
    %c1_i32_64 = arith.constant 1 : i32
    %163 = tpu.dynamic_rotate %162 by %c1_i32_64 dim 1 : vector<1x128xf32>, i32 -> vector<1x128xf32>
    %164 = arith.mulf %163, %20 : vector<1x128xf32>
    %165 = arith.addf %161, %164 : vector<1x128xf32>
    %166 = vector.extract_strided_slice %153 {offsets = [2, 0], sizes = [1, 128], strides = [1, 1]} : vector<7x128xf32> to vector<1x128xf32>
    %167 = arith.addf %165, %166 : vector<1x128xf32>
    %168 = vector.extract_strided_slice %153 {offsets = [3, 0], sizes = [1, 128], strides = [1, 1]} : vector<7x128xf32> to vector<1x128xf32>
    %c127_i32_65 = arith.constant 127 : i32
    %169 = tpu.dynamic_rotate %168 by %c127_i32_65 dim 1 : vector<1x128xf32>, i32 -> vector<1x128xf32>
    %170 = arith.mulf %169, %28 : vector<1x128xf32>
    %171 = arith.addf %167, %170 : vector<1x128xf32>
    %172 = vector.extract_strided_slice %153 {offsets = [4, 0], sizes = [1, 128], strides = [1, 1]} : vector<7x128xf32> to vector<1x128xf32>
    %c126_i32 = arith.constant 126 : i32
    %173 = tpu.dynamic_rotate %172 by %c126_i32 dim 1 : vector<1x128xf32>, i32 -> vector<1x128xf32>
    %174 = arith.mulf %173, %32 : vector<1x128xf32>
    %175 = arith.addf %171, %174 : vector<1x128xf32>
    %176 = vector.extract_strided_slice %153 {offsets = [5, 0], sizes = [1, 128], strides = [1, 1]} : vector<7x128xf32> to vector<1x128xf32>
    %177 = vector.broadcast %155 : f32 to vector<1x128xf32>
    %178 = arith.addf %176, %177 : vector<1x128xf32>
    %179 = arith.mulf %36, %178 : vector<1x128xf32>
    %180 = arith.subf %175, %179 : vector<1x128xf32>
    %181 = vector.extract_strided_slice %153 {offsets = [6, 0], sizes = [1, 128], strides = [1, 1]} : vector<7x128xf32> to vector<1x128xf32>
    %182 = vector.broadcast %156 : f32 to vector<1x128xf32>
    %183 = arith.addf %181, %182 : vector<1x128xf32>
    %184 = arith.mulf %40, %183 : vector<1x128xf32>
    %185 = arith.subf %180, %184 : vector<1x128xf32>
    %186 = math.tanh %185 : vector<1x128xf32>
    %c0_66 = arith.constant 0 : index
    %c0_67 = arith.constant 0 : index
    %187 = vector.load %arg10[%c0_66, %c0_67] : memref<1x128xf32, #tpu.memory_space<vmem>>, vector<1x128xf32>
    tpu.vector_store %arg10[%c0_66, %c0_67], %186 {strides = array<i32>} : memref<1x128xf32, #tpu.memory_space<vmem>>, vector<1x128xf32>,
    return
  }
  func.func @transform_0(%arg0: i32) -> i32 {
    %c0_i32 = arith.constant 0 : i32
    %c0_i32_0 = arith.constant 0 : i32
    return %c0_i32 : i32
  }
  func.func @transform_1(%arg0: i32) -> (i32, i32) {
    %c0_i32 = arith.constant 0 : i32
    %c0_i32_0 = arith.constant 0 : i32
    return %c0_i32, %arg0 : i32, i32
  }
  func.func @transform_2(%arg0: i32) -> (i32, i32, i32) {
    %c0_i32 = arith.constant 0 : i32
    %c0_i32_0 = arith.constant 0 : i32
    %c0_i32_1 = arith.constant 0 : i32
    %c0_i32_2 = arith.constant 0 : i32
    return %c0_i32, %c0_i32_0, %c0_i32_1 : i32, i32, i32
  }
  func.func @transform_3(%arg0: i32) -> (i32, i32) {
    %c0_i32 = arith.constant 0 : i32
    %c0_i32_0 = arith.constant 0 : i32
    %c0_i32_1 = arith.constant 0 : i32
    return %c0_i32, %c0_i32_0 : i32, i32
  }
  func.func @transform_4(%arg0: i32) -> (i32, i32, i32) {
    %c0_i32 = arith.constant 0 : i32
    %c0_i32_0 = arith.constant 0 : i32
    %c0_i32_1 = arith.constant 0 : i32
    %c0_i32_2 = arith.constant 0 : i32
    return %c0_i32, %c0_i32_0, %c0_i32_1 : i32, i32, i32
  }
  func.func @transform_5(%arg0: i32) -> (i32, i32, i32) {
    %c0_i32 = arith.constant 0 : i32
    %c0_i32_0 = arith.constant 0 : i32
    %c0_i32_1 = arith.constant 0 : i32
    %c0_i32_2 = arith.constant 0 : i32
    return %c0_i32, %c0_i32_0, %c0_i32_1 : i32, i32, i32
  }
  func.func @transform_6(%arg0: i32) -> (i32, i32, i32) {
    %c0_i32 = arith.constant 0 : i32
    %c0_i32_0 = arith.constant 0 : i32
    %c0_i32_1 = arith.constant 0 : i32
    %c0_i32_2 = arith.constant 0 : i32
    return %c0_i32, %c0_i32_0, %c0_i32_1 : i32, i32, i32
  }
  func.func @transform_7(%arg0: i32) -> (i32, i32, i32) {
    %c0_i32 = arith.constant 0 : i32
    %c0_i32_0 = arith.constant 0 : i32
    %c0_i32_1 = arith.constant 0 : i32
    %c0_i32_2 = arith.constant 0 : i32
    return %c0_i32, %c0_i32_0, %c0_i32_1 : i32, i32, i32
  }
  func.func @transform_8(%arg0: i32) -> (i32, i32) {
    %c0_i32 = arith.constant 0 : i32
    %c0_i32_0 = arith.constant 0 : i32
    %c0_i32_1 = arith.constant 0 : i32
    return %c0_i32, %c0_i32_0 : i32, i32
  }
  func.func @transform_9(%arg0: i32) -> (i32, i32) {
    %c0_i32 = arith.constant 0 : i32
    %c0_i32_0 = arith.constant 0 : i32
    return %c0_i32, %arg0 : i32, i32
  }
}

</mosaic_0001>

<llo_original>
// kernel: tpu_custom_call.1
$region0: #{tpu_custom_call.1}
  #allocation0 [shape = 'u32[]', space=smem, size = 0x4, offset = 0x4, fixed_abs, tag = 'smem constant byte address 0x4 - core index']
  #allocation1 [shape = 'u32[144,128]{1,0:T(1,128)}', space=vmem, size = 0x12000, scoped, tag = 'internal scratch']
  %s0 = inlined_call_operand.vmem [shape: f32[3], index: 0, kind: input, shape index: {}]
  %s1 = inlined_call_operand.vmem [shape: f32[4,128], index: 1, kind: input, shape index: {}]
  %s2 = inlined_call_operand.vmem [shape: f32[3,32,4], index: 2, kind: input, shape index: {}]
  %s3 = inlined_call_operand.vmem [shape: f32[32,1], index: 3, kind: input, shape index: {}]
  %s4 = inlined_call_operand.vmem [shape: f32[2,24,32], index: 4, kind: input, shape index: {}]
  %s5 = inlined_call_operand.vmem [shape: f32[2,8,1], index: 5, kind: input, shape index: {}]
  %s6 = inlined_call_operand.vmem [shape: f32[2,32,8], index: 6, kind: input, shape index: {}]
  %s7 = inlined_call_operand.vmem [shape: f32[2,32,1], index: 7, kind: input, shape index: {}]
  %s8 = inlined_call_operand.vmem [shape: f32[7,32], index: 8, kind: input, shape index: {}]
  %s9 = inlined_call_operand.hbm [shape: f32[1,128], index: 9, kind: output, shape index: {}]
  %s10 = sld [smem:[#allocation0]]
  $region50: #{tpu_custom_call.1} parent=0
    _
  %s12 = ssub.s32 1, %s10
  %s13 = scalar_select 0, %s12, %s10
  $region1: #{tpu_custom_call.1} parent=0
    #allocation2 [shape = 'u8[512]{0}', space=smem, size = 0x200, scoped, tag = 'input window, operand 0, single buffered']
    #allocation3 [shape = 's32[1]{0}', space=sflag, size = 0x4, scoped, tag = 'scoped memory for tpu_custom_call.1']
    #allocation4 [shape = 's32[1]{0}', space=sflag, size = 0x4, scoped, tag = 'scoped memory for tpu_custom_call.1']
    #allocation5 [shape = 'u8[512]{0}', space=vmem, size = 0x400, scoped, tag = 'output window, operand 0, single buffered']
    %14 = vsyncpa [#allocation4], 0
    %15 = vsyncpa [#allocation3], 0
    // Predicated region
    $region2: #{tpu_custom_call.1} parent=1 // pred_check
      _
    $region3: #{tpu_custom_call.1} parent=1 // pred_check_branch
      %17 = sbr.rel (0) target = $region5
    $region4: #{tpu_custom_call.1} parent=1 // pred_region
      %s19 = ssub.s32 16, 16
      %20 = vsyncadd [#allocation4], %s19
      %s22 = sshll.u32 %s0, 4
      %s23 = int_to_ptr.vmem [resolvable:$true] %s22
      %25 = dma.vmem_to_smem %s23, 16, [#allocation2], [#allocation4]
    $region5: #{tpu_custom_call.1} parent=1 // pred_fallthru
      _
    // Predicated region
    $region6: #{tpu_custom_call.1} parent=1 // pred_check
      _
    $region7: #{tpu_custom_call.1} parent=1 // pred_check_branch
      %27 = sbr.rel (0) target = $region9
    $region8: #{tpu_custom_call.1} parent=1 // pred_region
      _
    $region9: #{tpu_custom_call.1} parent=1 // pred_fallthru
      _
    // Predicated region
    $region10: #{tpu_custom_call.1} parent=1 // pred_check
      _
    $region11: #{tpu_custom_call.1} parent=1 // pred_check_branch
      %29 = sbr.rel (0) target = $region13
    $region12: #{tpu_custom_call.1} parent=1 // pred_region
      _
    $region13: #{tpu_custom_call.1} parent=1 // pred_fallthru
      _
    // Predicated region
    $region14: #{tpu_custom_call.1} parent=1 // pred_check
      _
    $region15: #{tpu_custom_call.1} parent=1 // pred_check_branch
      %31 = sbr.rel (0) target = $region17
    $region16: #{tpu_custom_call.1} parent=1 // pred_region
      _
    $region17: #{tpu_custom_call.1} parent=1 // pred_fallthru
      _
    // Predicated region
    $region18: #{tpu_custom_call.1} parent=1 // pred_check
      _
    $region19: #{tpu_custom_call.1} parent=1 // pred_check_branch
      %33 = sbr.rel (0) target = $region21
    $region20: #{tpu_custom_call.1} parent=1 // pred_region
      _
    $region21: #{tpu_custom_call.1} parent=1 // pred_fallthru
      _
    // Predicated region
    $region22: #{tpu_custom_call.1} parent=1 // pred_check
      _
    $region23: #{tpu_custom_call.1} parent=1 // pred_check_branch
      %35 = sbr.rel (0) target = $region25
    $region24: #{tpu_custom_call.1} parent=1 // pred_region
      _
    $region25: #{tpu_custom_call.1} parent=1 // pred_fallthru
      _
    // Predicated region
    $region26: #{tpu_custom_call.1} parent=1 // pred_check
      _
    $region27: #{tpu_custom_call.1} parent=1 // pred_check_branch
      %37 = sbr.rel (0) target = $region29
    $region28: #{tpu_custom_call.1} parent=1 // pred_region
      _
    $region29: #{tpu_custom_call.1} parent=1 // pred_fallthru
      _
    // Predicated region
    $region30: #{tpu_custom_call.1} parent=1 // pred_check
      _
    $region31: #{tpu_custom_call.1} parent=1 // pred_check_branch
      %39 = sbr.rel (0) target = $region33
    $region32: #{tpu_custom_call.1} parent=1 // pred_region
      _
    $region33: #{tpu_custom_call.1} parent=1 // pred_fallthru
      _
    // Predicated region
    $region34: #{tpu_custom_call.1} parent=1 // pred_check
      _
    $region35: #{tpu_custom_call.1} parent=1 // pred_check_branch
      %41 = sbr.rel (0) target = $region37
    $region36: #{tpu_custom_call.1} parent=1 // pred_region
      _
    $region37: #{tpu_custom_call.1} parent=1 // pred_fallthru
      _
    // Predicated region
    $region38: #{tpu_custom_call.1} parent=1 // pred_check
      _
    $region39: #{tpu_custom_call.1} parent=1 // pred_check_branch
      %43 = sbr.rel (0) target = $region41
    $region40: #{tpu_custom_call.1} parent=1 // pred_region
      %44 = dma.done [#allocation4], 16
    $region41: #{tpu_custom_call.1} parent=1 // pred_fallthru
      _
    %45 = sfence
    %v46 = vlaneseq
    %v47 = vand.u32 %v46, 127
    %vm48 = vcmp.lt.s32.totalorder %v47, 0
    %v49 = vsub.s32 0, %v47
    %v50 = vsel %vm48, %v49, %v47
    %v51 = vshrl.u32 %v50, 4
    %v52 = vand.u32 %v50, 15
    %v53 = vsub.s32 0, %v52
    %v54 = vsel %vm48, %v53, %v52
    %vm55 = vcmp.ne.s32.totalorder %v54, 0
    %vm56 = vcmp.lt.s32.totalorder %v54, 0
    %vm57 = vmand %vm56, %vm55
    %v58 = vadd.s32 %v54, 16
    %v59 = vsel %vm57, %v58, %v54
    %vm60 = vcmp.ge.s32.totalorder %v59, 1
    %v61 = vsel %vm60, 1, 0
    %v62 = vcvt.s32.f32 %v61
    %vm63 = vcmp.ge.s32.totalorder %v59, 2
    %v64 = vsel %vm63, 1, 0
    %v65 = vcvt.s32.f32 %v64
    %vm66 = vcmp.le.s32.totalorder %v59, 14
    %v67 = vsel %vm66, 1, 0
    %v68 = vcvt.s32.f32 %v67
    %vm69 = vcmp.le.s32.totalorder %v59, 13
    %v70 = vsel %vm69, 1, 0
    %v71 = vcvt.s32.f32 %v70
    %vm72 = vcmp.eq.s32.totalorder %v59, 0
    %v73 = vsel %vm72, 1, 0
    %v74 = vcvt.s32.f32 %v73
    %vm75 = vcmp.eq.s32.totalorder %v59, 15
    %v76 = vsel %vm75, 1, 0
    %v77 = vcvt.s32.f32 %v76
    %v78 = vld [vmem:[%s1] sm:$0xf]
    %s79 = scalar_lea.vmem %s2, 32
    %v80 = vld [vmem:[%s79] sm:$0xff]
    %v81 = vld [vmem:[%s79 + $0x8] sm:$0xff]
    %v82 = vld [vmem:[%s79 + $0x10] sm:$0xff]
    %v83 = vld [vmem:[%s79 + $0x18] sm:$0xff]
    %v84 = vld [vmem:[%s2] sm:$0xff]
    %v85 = vld [vmem:[%s2 + $0x8] sm:$0xff]
    %v86 = vld [vmem:[%s2 + $0x10] sm:$0xff]
    %v87 = vld [vmem:[%s2 + $0x18] sm:$0xff]
    %88 = vrot.lane.b32.xlu0 %v78, 1
    %v89 = vpop.permute.xlu0 %88
    %v90 = vmul.f32 %v89, %v62
    %vm91 = vcmask 31744
    %v93 = vsel %vm91, %v84, 0
    %v96 = vsel %vm91, %v85, 0
    %v99 = vsel %vm91, %v86, 0
    %v102 = vsel %vm91, %v87, 0
    %vm104 = vcmask 1043456
    %v106 = vsel %vm104, %v90, 0
    %108 = vmatprep.subr.mxu0 0.0
    %109 = vmatpush1.msra.mxu0 0.0
    %110 = vmatprep.subr.mxu0 0.0
    %111 = vmatpush1.msra.mxu0 0.0
    %112 = vmatprep.subr.mxu0 0.0
    %113 = vmatpush1.msra.mxu0 0.0
    %114 = vmatprep.subr.mxu0 0.0
    %115 = vmatpush1.msra.mxu0 0.0
    %116 = vmatprep.subr.mxu0 0.0
    %117 = vmatpush1.msra.mxu0 0.0
    %118 = vmatprep.subr.mxu0 0.0
    %119 = vmatpush1.msra.mxu0 0.0
    %120 = vmatprep.subr.mxu0 0.0
    %121 = vmatpush1.msra.mxu0 0.0
    %122 = vmatprep.subr.mxu0 0.0
    %123 = vmatpush1.msra.mxu0 0.0
    %124 = vmatprep.subr.mxu0 0.0
    %125 = vmatpush1.msra.mxu0 0.0
    %126 = vmatprep.subr.mxu0 0.0
    %127 = vmatpush1.msra.mxu0 0.0
    %128 = vmatprep.subr.mxu0 0.0
    %129 = vmatpush1.msra.mxu0 0.0
    %130 = vmatprep.subr.mxu0 0.0
    %131 = vmatpush1.msra.mxu0 0.0
    %132 = vmatprep.subr.mxu0 0.0
    %133 = vmatpush1.msra.mxu0 0.0
    %134 = vmatprep.subr.mxu0 0.0
    %135 = vmatpush1.msra.mxu0 0.0
    %136 = vmatprep.subr.mxu0 0.0
    %137 = vmatpush1.msra.mxu0 0.0
    %138 = vmatprep.subr.mxu0 0.0
    %139 = vmatpush1.msra.mxu0 %v106
    %140 = vmatprep.subr.mxu0 0.0
    %141 = vmatpush2.msra.mxu0 0.0
    %142 = vmatprep.subr.mxu0 0.0
    %143 = vmatpush2.msra.mxu0 0.0
    %144 = vmatprep.subr.mxu0 0.0
    %145 = vmatpush2.msra.mxu0 0.0
    %146 = vmatprep.subr.mxu0 0.0
    %147 = vmatpush2.msra.mxu0 0.0
    %148 = vmatprep.subr.mxu0 0.0
    %149 = vmatpush2.msra.mxu0 0.0
    %150 = vmatprep.subr.mxu0 0.0
    %151 = vmatpush2.msra.mxu0 0.0
    %152 = vmatprep.subr.mxu0 0.0
    %153 = vmatpush2.msra.mxu0 0.0
    %154 = vmatprep.subr.mxu0 0.0
    %155 = vmatpush2.msra.mxu0 0.0
    %156 = vmatprep.subr.mxu0 0.0
    %157 = vmatpush2.msra.mxu0 0.0
    %158 = vmatprep.subr.mxu0 0.0
    %159 = vmatpush2.msra.mxu0 0.0
    %160 = vmatprep.subr.mxu0 0.0
    %161 = vmatpush2.msra.mxu0 0.0
    %162 = vmatprep.subr.mxu0 0.0
    %163 = vmatpush2.msra.mxu0 0.0
    %164 = vmatprep.subr.mxu0 0.0
    %165 = vmatpush2.msra.mxu0 0.0
    %166 = vmatprep.subr.mxu0 0.0
    %167 = vmatpush2.msra.mxu0 0.0
    %168 = vmatprep.subr.mxu0 0.0
    %169 = vmatpush2.msra.mxu0 0.0
    %170 = vmatprep.subr.mxu0 0.0
    %171 = vmatpush2.msra.mxu0 0.0
    %172 = vmatprep.mubr.f32.mxu0 0.0
    %173 = vmatmul.mubr.f32.gmra.mxu0 %v93
    %v174 = vpop.f32.mrf.mxu0
    %v175 = vadd.f32 0.0, %v174
    %v176 = vpop.f32.mrf.mxu0
    %177 = vmatprep.mubr.f32.mxu0 0.0
    %178 = vmatmul.mubr.f32.gmra.mxu0 %v96
    %v179 = vpop.f32.mrf.mxu0
    %v180 = vadd.f32 0.0, %v179
    %v181 = vpop.f32.mrf.mxu0
    %182 = vmatprep.mubr.f32.mxu0 0.0
    %183 = vmatmul.mubr.f32.gmra.mxu0 %v99
    %v184 = vpop.f32.mrf.mxu0
    %v185 = vadd.f32 0.0, %v184
    %v186 = vpop.f32.mrf.mxu0
    %187 = vmatprep.mubr.f32.mxu0 0.0
    %188 = vmatmul.mubr.f32.gmra.mxu0 %v102
    %v189 = vpop.f32.mrf.mxu0
    %v190 = vadd.f32 0.0, %v189
    %v191 = vpop.f32.mrf.mxu0
    %192 = vdwg.mxu0
    %v194 = vsel %vm91, %v80, 0
    %v197 = vsel %vm91, %v81, 0
    %v200 = vsel %vm91, %v82, 0
    %v203 = vsel %vm91, %v83, 0
    %v206 = vsel %vm104, %v78, 0
    %208 = vmatprep.subr.mxu0 0.0
    %209 = vmatpush1.msra.mxu0 0.0
    %210 = vmatprep.subr.mxu0 0.0
    %211 = vmatpush1.msra.mxu0 0.0
    %212 = vmatprep.subr.mxu0 0.0
    %213 = vmatpush1.msra.mxu0 0.0
    %214 = vmatprep.subr.mxu0 0.0
    %215 = vmatpush1.msra.mxu0 0.0
    %216 = vmatprep.subr.mxu0 0.0
    %217 = vmatpush1.msra.mxu0 0.0
    %218 = vmatprep.subr.mxu0 0.0
    %219 = vmatpush1.msra.mxu0 0.0
    %220 = vmatprep.subr.mxu0 0.0
    %221 = vmatpush1.msra.mxu0 0.0
    %222 = vmatprep.subr.mxu0 0.0
    %223 = vmatpush1.msra.mxu0 0.0
    %224 = vmatprep.subr.mxu0 0.0
    %225 = vmatpush1.msra.mxu0 0.0
    %226 = vmatprep.subr.mxu0 0.0
    %227 = vmatpush1.msra.mxu0 0.0
    %228 = vmatprep.subr.mxu0 0.0
    %229 = vmatpush1.msra.mxu0 0.0
    %230 = vmatprep.subr.mxu0 0.0
    %231 = vmatpush1.msra.mxu0 0.0
    %232 = vmatprep.subr.mxu0 0.0
    %233 = vmatpush1.msra.mxu0 0.0
    %234 = vmatprep.subr.mxu0 0.0
    %235 = vmatpush1.msra.mxu0 0.0
    %236 = vmatprep.subr.mxu0 0.0
    %237 = vmatpush1.msra.mxu0 0.0
    %238 = vmatprep.subr.mxu0 0.0
    %239 = vmatpush1.msra.mxu0 %v206
    %240 = vmatprep.subr.mxu0 0.0
    %241 = vmatpush2.msra.mxu0 0.0
    %242 = vmatprep.subr.mxu0 0.0
    %243 = vmatpush2.msra.mxu0 0.0
    %244 = vmatprep.subr.mxu0 0.0
    %245 = vmatpush2.msra.mxu0 0.0
    %246 = vmatprep.subr.mxu0 0.0
    %247 = vmatpush2.msra.mxu0 0.0
    %248 = vmatprep.subr.mxu0 0.0
    %249 = vmatpush2.msra.mxu0 0.0
    %250 = vmatprep.subr.mxu0 0.0
    %251 = vmatpush2.msra.mxu0 0.0
    %252 = vmatprep.subr.mxu0 0.0
    %253 = vmatpush2.msra.mxu0 0.0
    %254 = vmatprep.subr.mxu0 0.0
    %255 = vmatpush2.msra.mxu0 0.0
    %256 = vmatprep.subr.mxu0 0.0
    %257 = vmatpush2.msra.mxu0 0.0
    %258 = vmatprep.subr.mxu0 0.0
    %259 = vmatpush2.msra.mxu0 0.0
    %260 = vmatprep.subr.mxu0 0.0
    %261 = vmatpush2.msra.mxu0 0.0
    %262 = vmatprep.subr.mxu0 0.0
    %263 = vmatpush2.msra.mxu0 0.0
    %264 = vmatprep.subr.mxu0 0.0
    %265 = vmatpush2.msra.mxu0 0.0
    %266 = vmatprep.subr.mxu0 0.0
    %267 = vmatpush2.msra.mxu0 0.0
    %268 = vmatprep.subr.mxu0 0.0
    %269 = vmatpush2.msra.mxu0 0.0
    %270 = vmatprep.subr.mxu0 0.0
    %271 = vmatpush2.msra.mxu0 0.0
    %272 = vmatprep.mubr.f32.mxu0 0.0
    %273 = vmatmul.mubr.f32.gmra.mxu0 %v194
    %v274 = vpop.f32.mrf.mxu0
    %v275 = vadd.f32 %v175, %v274
    %v276 = vpop.f32.mrf.mxu0
    %277 = vmatprep.mubr.f32.mxu0 0.0
    %278 = vmatmul.mubr.f32.gmra.mxu0 %v197
    %v279 = vpop.f32.mrf.mxu0
    %v280 = vadd.f32 %v180, %v279
    %v281 = vpop.f32.mrf.mxu0
    %282 = vmatprep.mubr.f32.mxu0 0.0
    %283 = vmatmul.mubr.f32.gmra.mxu0 %v200
    %v284 = vpop.f32.mrf.mxu0
    %v285 = vadd.f32 %v185, %v284
    %v286 = vpop.f32.mrf.mxu0
    %287 = vmatprep.mubr.f32.mxu0 0.0
    %288 = vmatmul.mubr.f32.gmra.mxu0 %v203
    %v289 = vpop.f32.mrf.mxu0
    %v290 = vadd.f32 %v190, %v289
    %v291 = vpop.f32.mrf.mxu0
    %292 = vdwg.mxu0
    %s293 = scalar_lea.vmem %s2, 64
    %v294 = vld [vmem:[%s293] sm:$0xff]
    %v295 = vld [vmem:[%s293 + $0x8] sm:$0xff]
    %v296 = vld [vmem:[%s293 + $0x10] sm:$0xff]
    %v297 = vld [vmem:[%s293 + $0x18] sm:$0xff]
    %298 = vrot.lane.b32.xlu0 %v78, 127
    %v299 = vpop.permute.xlu0 %298
    %v300 = vmul.f32 %v299, %v68
    %v302 = vsel %vm91, %v294, 0
    %v305 = vsel %vm91, %v295, 0
    %v308 = vsel %vm91, %v296, 0
    %v311 = vsel %vm91, %v297, 0
    %v314 = vsel %vm104, %v300, 0
    %316 = vmatprep.subr.mxu0 0.0
    %317 = vmatpush1.msra.mxu0 0.0
    %318 = vmatprep.subr.mxu0 0.0
    %319 = vmatpush1.msra.mxu0 0.0
    %320 = vmatprep.subr.mxu0 0.0
    %321 = vmatpush1.msra.mxu0 0.0
    %322 = vmatprep.subr.mxu0 0.0
    %323 = vmatpush1.msra.mxu0 0.0
    %324 = vmatprep.subr.mxu0 0.0
    %325 = vmatpush1.msra.mxu0 0.0
    %326 = vmatprep.subr.mxu0 0.0
    %327 = vmatpush1.msra.mxu0 0.0
    %328 = vmatprep.subr.mxu0 0.0
    %329 = vmatpush1.msra.mxu0 0.0
    %330 = vmatprep.subr.mxu0 0.0
    %331 = vmatpush1.msra.mxu0 0.0
    %332 = vmatprep.subr.mxu0 0.0
    %333 = vmatpush1.msra.mxu0 0.0
    %334 = vmatprep.subr.mxu0 0.0
    %335 = vmatpush1.msra.mxu0 0.0
    %336 = vmatprep.subr.mxu0 0.0
    %337 = vmatpush1.msra.mxu0 0.0
    %338 = vmatprep.subr.mxu0 0.0
    %339 = vmatpush1.msra.mxu0 0.0
    %340 = vmatprep.subr.mxu0 0.0
    %341 = vmatpush1.msra.mxu0 0.0
    %342 = vmatprep.subr.mxu0 0.0
    %343 = vmatpush1.msra.mxu0 0.0
    %344 = vmatprep.subr.mxu0 0.0
    %345 = vmatpush1.msra.mxu0 0.0
    %346 = vmatprep.subr.mxu0 0.0
    %347 = vmatpush1.msra.mxu0 %v314
    %348 = vmatprep.subr.mxu0 0.0
    %349 = vmatpush2.msra.mxu0 0.0
    %350 = vmatprep.subr.mxu0 0.0
    %351 = vmatpush2.msra.mxu0 0.0
    %352 = vmatprep.subr.mxu0 0.0
    %353 = vmatpush2.msra.mxu0 0.0
    %354 = vmatprep.subr.mxu0 0.0
    %355 = vmatpush2.msra.mxu0 0.0
    %356 = vmatprep.subr.mxu0 0.0
    %357 = vmatpush2.msra.mxu0 0.0
    %358 = vmatprep.subr.mxu0 0.0
    %359 = vmatpush2.msra.mxu0 0.0
    %360 = vmatprep.subr.mxu0 0.0
    %361 = vmatpush2.msra.mxu0 0.0
    %362 = vmatprep.subr.mxu0 0.0
    %363 = vmatpush2.msra.mxu0 0.0
    %364 = vmatprep.subr.mxu0 0.0
    %365 = vmatpush2.msra.mxu0 0.0
    %366 = vmatprep.subr.mxu0 0.0
    %367 = vmatpush2.msra.mxu0 0.0
    %368 = vmatprep.subr.mxu0 0.0
    %369 = vmatpush2.msra.mxu0 0.0
    %370 = vmatprep.subr.mxu0 0.0
    %371 = vmatpush2.msra.mxu0 0.0
    %372 = vmatprep.subr.mxu0 0.0
    %373 = vmatpush2.msra.mxu0 0.0
    %374 = vmatprep.subr.mxu0 0.0
    %375 = vmatpush2.msra.mxu0 0.0
    %376 = vmatprep.subr.mxu0 0.0
    %377 = vmatpush2.msra.mxu0 0.0
    %378 = vmatprep.subr.mxu0 0.0
    %379 = vmatpush2.msra.mxu0 0.0
    %380 = vmatprep.mubr.f32.mxu0 0.0
    %381 = vmatmul.mubr.f32.gmra.mxu0 %v302
    %v382 = vpop.f32.mrf.mxu0
    %v383 = vadd.f32 0.0, %v382
    %v384 = vpop.f32.mrf.mxu0
    %385 = vmatprep.mubr.f32.mxu0 0.0
    %386 = vmatmul.mubr.f32.gmra.mxu0 %v305
    %v387 = vpop.f32.mrf.mxu0
    %v388 = vadd.f32 0.0, %v387
    %v389 = vpop.f32.mrf.mxu0
    %390 = vmatprep.mubr.f32.mxu0 0.0
    %391 = vmatmul.mubr.f32.gmra.mxu0 %v308
    %v392 = vpop.f32.mrf.mxu0
    %v393 = vadd.f32 0.0, %v392
    %v394 = vpop.f32.mrf.mxu0
    %395 = vmatprep.mubr.f32.mxu0 0.0
    %396 = vmatmul.mubr.f32.gmra.mxu0 %v311
    %v397 = vpop.f32.mrf.mxu0
    %v398 = vadd.f32 0.0, %v397
    %v399 = vpop.f32.mrf.mxu0
    %400 = vdwg.mxu0
    %v401 = vadd.f32 %v275, %v383
    %v402 = vadd.f32 %v280, %v388
    %v403 = vadd.f32 %v285, %v393
    %v404 = vadd.f32 %v290, %v398
    %v405 = vld [vmem:[%s3] sm:$0xff]
    %v406 = vld [vmem:[%s3 + $0x8] sm:$0xff]
    %v407 = vld [vmem:[%s3 + $0x10] sm:$0xff]
    %v408 = vld [vmem:[%s3 + $0x18] sm:$0xff]
    %410 = vset.pattern.permute.xlu0 0
    %411 = vperm.xlu0 %410, %v405
    %v412 = vpop.permute.xlu0 %411
    %415 = vset.pattern.permute.xlu0 0
    %416 = vperm.xlu0 %415, %v406
    %v417 = vpop.permute.xlu0 %416
    %420 = vset.pattern.permute.xlu0 0
    %421 = vperm.xlu0 %420, %v407
    %v422 = vpop.permute.xlu0 %421
    %425 = vset.pattern.permute.xlu0 0
    %426 = vperm.xlu0 %425, %v408
    %v427 = vpop.permute.xlu0 %426
    %v429 = vadd.f32 %v401, %v412
    %v430 = vadd.f32 %v402, %v417
    %v431 = vadd.f32 %v403, %v422
    %v432 = vadd.f32 %v404, %v427
    %vm433 = vcmp.ge.f32.partialorder %v429, 0.0
    %vm434 = vcmp.ge.f32.partialorder %v430, 0.0
    %vm435 = vcmp.ge.f32.partialorder %v431, 0.0
    %vm436 = vcmp.ge.f32.partialorder %v432, 0.0
    %v437 = vmul.f32 %v429, 0.2
    %v438 = vmul.f32 %v430, 0.2
    %v439 = vmul.f32 %v431, 0.2
    %v440 = vmul.f32 %v432, 0.2
    %v441 = vsel %vm433, %v429, %v437
    %v442 = vsel %vm434, %v430, %v438
    %v443 = vsel %vm435, %v431, %v439
    %v444 = vsel %vm436, %v432, %v440
    %vm445 = vcmp.ge.f32.partialorder %v441, 0.0
    %vm446 = vcmp.ge.f32.partialorder %v442, 0.0
    %vm447 = vcmp.ge.f32.partialorder %v443, 0.0
    %vm448 = vcmp.ge.f32.partialorder %v444, 0.0
    %v449 = vmul.f32 %v441, 0.2
    %v450 = vmul.f32 %v442, 0.2
    %v451 = vmul.f32 %v443, 0.2
    %v452 = vmul.f32 %v444, 0.2
    %v453 = vsel %vm445, %v441, %v449
    %v454 = vsel %vm446, %v442, %v450
    %v455 = vsel %vm447, %v443, %v451
    %v456 = vsel %vm448, %v444, %v452
    %v457 = vld [vmem:[%s4] sm:$0xff]
    %v458 = vld [vmem:[%s4 + $0x8] sm:$0xff]
    %v459 = vld [vmem:[%s4 + $0x10] sm:$0xff]
    %vm460 = vcmask 261120
    %v462 = vsel %vm460, %v457, 0
    %v465 = vsel %vm460, %v458, 0
    %v468 = vsel %vm460, %v459, 0
    %470 = vmatprep.subr.mxu0 0.0
    %471 = vmatpush1.msra.mxu0 0.0
    %472 = vmatprep.subr.mxu0 0.0
    %473 = vmatpush1.msra.mxu0 0.0
    %474 = vmatprep.subr.mxu0 0.0
    %475 = vmatpush1.msra.mxu0 0.0
    %476 = vmatprep.subr.mxu0 0.0
    %477 = vmatpush1.msra.mxu0 0.0
    %478 = vmatprep.subr.mxu0 0.0
    %479 = vmatpush1.msra.mxu0 0.0
    %480 = vmatprep.subr.mxu0 0.0
    %481 = vmatpush1.msra.mxu0 0.0
    %482 = vmatprep.subr.mxu0 0.0
    %483 = vmatpush1.msra.mxu0 0.0
    %484 = vmatprep.subr.mxu0 0.0
    %485 = vmatpush1.msra.mxu0 0.0
    %486 = vmatprep.subr.mxu0 0.0
    %487 = vmatpush1.msra.mxu0 0.0
    %488 = vmatprep.subr.mxu0 0.0
    %489 = vmatpush1.msra.mxu0 0.0
    %490 = vmatprep.subr.mxu0 0.0
    %491 = vmatpush1.msra.mxu0 0.0
    %492 = vmatprep.subr.mxu0 0.0
    %493 = vmatpush1.msra.mxu0 0.0
    %494 = vmatprep.subr.mxu0 0.0
    %495 = vmatpush1.msra.mxu0 %v456
    %496 = vmatprep.subr.mxu0 0.0
    %497 = vmatpush1.msra.mxu0 %v455
    %498 = vmatprep.subr.mxu0 0.0
    %499 = vmatpush1.msra.mxu0 %v454
    %500 = vmatprep.subr.mxu0 0.0
    %501 = vmatpush1.msra.mxu0 %v453
    %502 = vmatprep.subr.mxu0 0.0
    %503 = vmatpush2.msra.mxu0 0.0
    %504 = vmatprep.subr.mxu0 0.0
    %505 = vmatpush2.msra.mxu0 0.0
    %506 = vmatprep.subr.mxu0 0.0
    %507 = vmatpush2.msra.mxu0 0.0
    %508 = vmatprep.subr.mxu0 0.0
    %509 = vmatpush2.msra.mxu0 0.0
    %510 = vmatprep.subr.mxu0 0.0
    %511 = vmatpush2.msra.mxu0 0.0
    %512 = vmatprep.subr.mxu0 0.0
    %513 = vmatpush2.msra.mxu0 0.0
    %514 = vmatprep.subr.mxu0 0.0
    %515 = vmatpush2.msra.mxu0 0.0
    %516 = vmatprep.subr.mxu0 0.0
    %517 = vmatpush2.msra.mxu0 0.0
    %518 = vmatprep.subr.mxu0 0.0
    %519 = vmatpush2.msra.mxu0 0.0
    %520 = vmatprep.subr.mxu0 0.0
    %521 = vmatpush2.msra.mxu0 0.0
    %522 = vmatprep.subr.mxu0 0.0
    %523 = vmatpush2.msra.mxu0 0.0
    %524 = vmatprep.subr.mxu0 0.0
    %525 = vmatpush2.msra.mxu0 0.0
    %526 = vmatprep.subr.mxu0 0.0
    %527 = vmatpush2.msra.mxu0 0.0
    %528 = vmatprep.subr.mxu0 0.0
    %529 = vmatpush2.msra.mxu0 0.0
    %530 = vmatprep.subr.mxu0 0.0
    %531 = vmatpush2.msra.mxu0 0.0
    %532 = vmatprep.subr.mxu0 0.0
    %533 = vmatpush2.msra.mxu0 0.0
    %534 = vmatprep.mubr.f32.mxu0 0.0
    %535 = vmatmul.mubr.f32.gmra.mxu0 %v462
    %v536 = vpop.f32.mrf.mxu0
    %v537 = vadd.f32 0.0, %v536
    %v538 = vpop.f32.mrf.mxu0
    %539 = vmatprep.mubr.f32.mxu0 0.0
    %540 = vmatmul.mubr.f32.gmra.mxu0 %v465
    %v541 = vpop.f32.mrf.mxu0
    %v542 = vadd.f32 0.0, %v541
    %v543 = vpop.f32.mrf.mxu0
    %544 = vmatprep.mubr.f32.mxu0 0.0
    %545 = vmatmul.mubr.f32.gmra.mxu0 %v468
    %v546 = vpop.f32.mrf.mxu0
    %v547 = vadd.f32 0.0, %v546
    %v548 = vpop.f32.mrf.mxu0
    %549 = vdwg.mxu0
    %550 = vrot.lane.b32.xlu0 %v537, 1
    %v551 = vpop.permute.xlu0 %550
    %v552 = vmul.f32 %v551, %v62
    %v553 = vadd.f32 %v542, %v552
    %554 = vrot.lane.b32.xlu0 %v547, 127
    %v555 = vpop.permute.xlu0 %554
    %v556 = vmul.f32 %v555, %v68
    %v557 = vadd.f32 %v553, %v556
    %v558 = vld [vmem:[%s5] sm:$0xff]
    %560 = vset.pattern.permute.xlu0 0
    %561 = vperm.xlu0 %560, %v558
    %v562 = vpop.permute.xlu0 %561
    %v564 = vadd.f32 %v557, %v562
    %vm565 = vcmp.ge.f32.partialorder %v564, 0.0
    %v566 = vmul.f32 %v564, 0.2
    %v567 = vsel %vm565, %v564, %v566
    %v568 = vld [vmem:[%s6] sm:$0xff]
    %v569 = vld [vmem:[%s6 + $0x8] sm:$0xff]
    %v570 = vld [vmem:[%s6 + $0x10] sm:$0xff]
    %v571 = vld [vmem:[%s6 + $0x18] sm:$0xff]
    %v572 = vld [vmem:[%s7] sm:$0xff]
    %v573 = vld [vmem:[%s7 + $0x8] sm:$0xff]
    %v574 = vld [vmem:[%s7 + $0x10] sm:$0xff]
    %v575 = vld [vmem:[%s7 + $0x18] sm:$0xff]
    %577 = vset.pattern.permute.xlu0 0
    %578 = vperm.xlu0 %577, %v572
    %v579 = vpop.permute.xlu0 %578
    %582 = vset.pattern.permute.xlu0 0
    %583 = vperm.xlu0 %582, %v573
    %v584 = vpop.permute.xlu0 %583
    %587 = vset.pattern.permute.xlu0 0
    %588 = vperm.xlu0 %587, %v574
    %v589 = vpop.permute.xlu0 %588
    %592 = vset.pattern.permute.xlu0 0
    %593 = vperm.xlu0 %592, %v575
    %v594 = vpop.permute.xlu0 %593
    %vm596 = vcmask 64512
    %v598 = vsel %vm596, %v568, 0
    %v601 = vsel %vm596, %v569, 0
    %v604 = vsel %vm596, %v570, 0
    %v607 = vsel %vm596, %v571, 0
    %609 = vmatprep.subr.mxu0 0.0
    %610 = vmatpush1.msra.mxu0 0.0
    %611 = vmatprep.subr.mxu0 0.0
    %612 = vmatpush1.msra.mxu0 0.0
    %613 = vmatprep.subr.mxu0 0.0
    %614 = vmatpush1.msra.mxu0 0.0
    %615 = vmatprep.subr.mxu0 0.0
    %616 = vmatpush1.msra.mxu0 0.0
    %617 = vmatprep.subr.mxu0 0.0
    %618 = vmatpush1.msra.mxu0 0.0
    %619 = vmatprep.subr.mxu0 0.0
    %620 = vmatpush1.msra.mxu0 0.0
    %621 = vmatprep.subr.mxu0 0.0
    %622 = vmatpush1.msra.mxu0 0.0
    %623 = vmatprep.subr.mxu0 0.0
    %624 = vmatpush1.msra.mxu0 0.0
    %625 = vmatprep.subr.mxu0 0.0
    %626 = vmatpush1.msra.mxu0 0.0
    %627 = vmatprep.subr.mxu0 0.0
    %628 = vmatpush1.msra.mxu0 0.0
    %629 = vmatprep.subr.mxu0 0.0
    %630 = vmatpush1.msra.mxu0 0.0
    %631 = vmatprep.subr.mxu0 0.0
    %632 = vmatpush1.msra.mxu0 0.0
    %633 = vmatprep.subr.mxu0 0.0
    %634 = vmatpush1.msra.mxu0 0.0
    %635 = vmatprep.subr.mxu0 0.0
    %636 = vmatpush1.msra.mxu0 0.0
    %637 = vmatprep.subr.mxu0 0.0
    %638 = vmatpush1.msra.mxu0 0.0
    %639 = vmatprep.subr.mxu0 0.0
    %640 = vmatpush1.msra.mxu0 %v567
    %641 = vmatprep.subr.mxu0 0.0
    %642 = vmatpush2.msra.mxu0 0.0
    %643 = vmatprep.subr.mxu0 0.0
    %644 = vmatpush2.msra.mxu0 0.0
    %645 = vmatprep.subr.mxu0 0.0
    %646 = vmatpush2.msra.mxu0 0.0
    %647 = vmatprep.subr.mxu0 0.0
    %648 = vmatpush2.msra.mxu0 0.0
    %649 = vmatprep.subr.mxu0 0.0
    %650 = vmatpush2.msra.mxu0 0.0
    %651 = vmatprep.subr.mxu0 0.0
    %652 = vmatpush2.msra.mxu0 0.0
    %653 = vmatprep.subr.mxu0 0.0
    %654 = vmatpush2.msra.mxu0 0.0
    %655 = vmatprep.subr.mxu0 0.0
    %656 = vmatpush2.msra.mxu0 0.0
    %657 = vmatprep.subr.mxu0 0.0
    %658 = vmatpush2.msra.mxu0 0.0
    %659 = vmatprep.subr.mxu0 0.0
    %660 = vmatpush2.msra.mxu0 0.0
    %661 = vmatprep.subr.mxu0 0.0
    %662 = vmatpush2.msra.mxu0 0.0
    %663 = vmatprep.subr.mxu0 0.0
    %664 = vmatpush2.msra.mxu0 0.0
    %665 = vmatprep.subr.mxu0 0.0
    %666 = vmatpush2.msra.mxu0 0.0
    %667 = vmatprep.subr.mxu0 0.0
    %668 = vmatpush2.msra.mxu0 0.0
    %669 = vmatprep.subr.mxu0 0.0
    %670 = vmatpush2.msra.mxu0 0.0
    %671 = vmatprep.subr.mxu0 0.0
    %672 = vmatpush2.msra.mxu0 0.0
    %673 = vmatprep.mubr.f32.mxu0 0.0
    %674 = vmatmul.mubr.f32.gmra.mxu0 %v598
    %v675 = vpop.f32.mrf.mxu0
    %v676 = vadd.f32 %v579, %v675
    %v677 = vpop.f32.mrf.mxu0
    %678 = vmatprep.mubr.f32.mxu0 0.0
    %679 = vmatmul.mubr.f32.gmra.mxu0 %v601
    %v680 = vpop.f32.mrf.mxu0
    %v681 = vadd.f32 %v584, %v680
    %v682 = vpop.f32.mrf.mxu0
    %683 = vmatprep.mubr.f32.mxu0 0.0
    %684 = vmatmul.mubr.f32.gmra.mxu0 %v604
    %v685 = vpop.f32.mrf.mxu0
    %v686 = vadd.f32 %v589, %v685
    %v687 = vpop.f32.mrf.mxu0
    %688 = vmatprep.mubr.f32.mxu0 0.0
    %689 = vmatmul.mubr.f32.gmra.mxu0 %v607
    %v690 = vpop.f32.mrf.mxu0
    %v691 = vadd.f32 %v594, %v690
    %v692 = vpop.f32.mrf.mxu0
    %693 = vdwg.mxu0
    %v694 = vadd.f32 %v441, %v676
    %v695 = vadd.f32 %v442, %v681
    %v696 = vadd.f32 %v443, %v686
    %v697 = vadd.f32 %v444, %v691
    %vm698 = vcmp.ge.f32.partialorder %v694, 0.0
    %vm699 = vcmp.ge.f32.partialorder %v695, 0.0
    %vm700 = vcmp.ge.f32.partialorder %v696, 0.0
    %vm701 = vcmp.ge.f32.partialorder %v697, 0.0
    %v702 = vmul.f32 %v694, 0.2
    %v703 = vmul.f32 %v695, 0.2
    %v704 = vmul.f32 %v696, 0.2
    %v705 = vmul.f32 %v697, 0.2
    %v706 = vsel %vm698, %v694, %v702
    %v707 = vsel %vm699, %v695, %v703
    %v708 = vsel %vm700, %v696, %v704
    %v709 = vsel %vm701, %v697, %v705
    %s710 = scalar_lea.vmem %s4, 24
    %v711 = vld [vmem:[%s710] sm:$0xff]
    %v712 = vld [vmem:[%s710 + $0x8] sm:$0xff]
    %v713 = vld [vmem:[%s710 + $0x10] sm:$0xff]
    %v715 = vsel %vm460, %v711, 0
    %v718 = vsel %vm460, %v712, 0
    %v721 = vsel %vm460, %v713, 0
    %723 = vmatprep.subr.mxu0 0.0
    %724 = vmatpush1.msra.mxu0 0.0
    %725 = vmatprep.subr.mxu0 0.0
    %726 = vmatpush1.msra.mxu0 0.0
    %727 = vmatprep.subr.mxu0 0.0
    %728 = vmatpush1.msra.mxu0 0.0
    %729 = vmatprep.subr.mxu0 0.0
    %730 = vmatpush1.msra.mxu0 0.0
    %731 = vmatprep.subr.mxu0 0.0
    %732 = vmatpush1.msra.mxu0 0.0
    %733 = vmatprep.subr.mxu0 0.0
    %734 = vmatpush1.msra.mxu0 0.0
    %735 = vmatprep.subr.mxu0 0.0
    %736 = vmatpush1.msra.mxu0 0.0
    %737 = vmatprep.subr.mxu0 0.0
    %738 = vmatpush1.msra.mxu0 0.0
    %739 = vmatprep.subr.mxu0 0.0
    %740 = vmatpush1.msra.mxu0 0.0
    %741 = vmatprep.subr.mxu0 0.0
    %742 = vmatpush1.msra.mxu0 0.0
    %743 = vmatprep.subr.mxu0 0.0
    %744 = vmatpush1.msra.mxu0 0.0
    %745 = vmatprep.subr.mxu0 0.0
    %746 = vmatpush1.msra.mxu0 0.0
    %747 = vmatprep.subr.mxu0 0.0
    %748 = vmatpush1.msra.mxu0 %v709
    %749 = vmatprep.subr.mxu0 0.0
    %750 = vmatpush1.msra.mxu0 %v708
    %751 = vmatprep.subr.mxu0 0.0
    %752 = vmatpush1.msra.mxu0 %v707
    %753 = vmatprep.subr.mxu0 0.0
    %754 = vmatpush1.msra.mxu0 %v706
    %755 = vmatprep.subr.mxu0 0.0
    %756 = vmatpush2.msra.mxu0 0.0
    %757 = vmatprep.subr.mxu0 0.0
    %758 = vmatpush2.msra.mxu0 0.0
    %759 = vmatprep.subr.mxu0 0.0
    %760 = vmatpush2.msra.mxu0 0.0
    %761 = vmatprep.subr.mxu0 0.0
    %762 = vmatpush2.msra.mxu0 0.0
    %763 = vmatprep.subr.mxu0 0.0
    %764 = vmatpush2.msra.mxu0 0.0
    %765 = vmatprep.subr.mxu0 0.0
    %766 = vmatpush2.msra.mxu0 0.0
    %767 = vmatprep.subr.mxu0 0.0
    %768 = vmatpush2.msra.mxu0 0.0
    %769 = vmatprep.subr.mxu0 0.0
    %770 = vmatpush2.msra.mxu0 0.0
    %771 = vmatprep.subr.mxu0 0.0
    %772 = vmatpush2.msra.mxu0 0.0
    %773 = vmatprep.subr.mxu0 0.0
    %774 = vmatpush2.msra.mxu0 0.0
    %775 = vmatprep.subr.mxu0 0.0
    %776 = vmatpush2.msra.mxu0 0.0
    %777 = vmatprep.subr.mxu0 0.0
    %778 = vmatpush2.msra.mxu0 0.0
    %779 = vmatprep.subr.mxu0 0.0
    %780 = vmatpush2.msra.mxu0 0.0
    %781 = vmatprep.subr.mxu0 0.0
    %782 = vmatpush2.msra.mxu0 0.0
    %783 = vmatprep.subr.mxu0 0.0
    %784 = vmatpush2.msra.mxu0 0.0
    %785 = vmatprep.subr.mxu0 0.0
    %786 = vmatpush2.msra.mxu0 0.0
    %787 = vmatprep.mubr.f32.mxu0 0.0
    %788 = vmatmul.mubr.f32.gmra.mxu0 %v715
    %v789 = vpop.f32.mrf.mxu0
    %v790 = vadd.f32 0.0, %v789
    %v791 = vpop.f32.mrf.mxu0
    %792 = vmatprep.mubr.f32.mxu0 0.0
    %793 = vmatmul.mubr.f32.gmra.mxu0 %v718
    %v794 = vpop.f32.mrf.mxu0
    %v795 = vadd.f32 0.0, %v794
    %v796 = vpop.f32.mrf.mxu0
    %797 = vmatprep.mubr.f32.mxu0 0.0
    %798 = vmatmul.mubr.f32.gmra.mxu0 %v721
    %v799 = vpop.f32.mrf.mxu0
    %v800 = vadd.f32 0.0, %v799
    %v801 = vpop.f32.mrf.mxu0
    %802 = vdwg.mxu0
    %803 = vrot.lane.b32.xlu0 %v790, 1
    %v804 = vpop.permute.xlu0 %803
    %v805 = vmul.f32 %v804, %v62
    %v806 = vadd.f32 %v795, %v805
    %807 = vrot.lane.b32.xlu0 %v800, 127
    %v808 = vpop.permute.xlu0 %807
    %v809 = vmul.f32 %v808, %v68
    %v810 = vadd.f32 %v806, %v809
    %s811 = scalar_lea.vmem %s5, 8
    %v812 = vld [vmem:[%s811] sm:$0xff]
    %814 = vset.pattern.permute.xlu0 0
    %815 = vperm.xlu0 %814, %v812
    %v816 = vpop.permute.xlu0 %815
    %v818 = vadd.f32 %v810, %v816
    %vm819 = vcmp.ge.f32.partialorder %v818, 0.0
    %v820 = vmul.f32 %v818, 0.2
    %v821 = vsel %vm819, %v818, %v820
    %s822 = scalar_lea.vmem %s6, 32
    %v823 = vld [vmem:[%s822] sm:$0xff]
    %v824 = vld [vmem:[%s822 + $0x8] sm:$0xff]
    %v825 = vld [vmem:[%s822 + $0x10] sm:$0xff]
    %v826 = vld [vmem:[%s822 + $0x18] sm:$0xff]
    %s827 = scalar_lea.vmem %s7, 32
    %v828 = vld [vmem:[%s827] sm:$0xff]
    %v829 = vld [vmem:[%s827 + $0x8] sm:$0xff]
    %v830 = vld [vmem:[%s827 + $0x10] sm:$0xff]
    %v831 = vld [vmem:[%s827 + $0x18] sm:$0xff]
    %833 = vset.pattern.permute.xlu0 0
    %834 = vperm.xlu0 %833, %v828
    %v835 = vpop.permute.xlu0 %834
    %838 = vset.pattern.permute.xlu0 0
    %839 = vperm.xlu0 %838, %v829
    %v840 = vpop.permute.xlu0 %839
    %843 = vset.pattern.permute.xlu0 0
    %844 = vperm.xlu0 %843, %v830
    %v845 = vpop.permute.xlu0 %844
    %848 = vset.pattern.permute.xlu0 0
    %849 = vperm.xlu0 %848, %v831
    %v850 = vpop.permute.xlu0 %849
    %v853 = vsel %vm596, %v823, 0
    %v856 = vsel %vm596, %v824, 0
    %v859 = vsel %vm596, %v825, 0
    %v862 = vsel %vm596, %v826, 0
    %864 = vmatprep.subr.mxu0 0.0
    %865 = vmatpush1.msra.mxu0 0.0
    %866 = vmatprep.subr.mxu0 0.0
    %867 = vmatpush1.msra.mxu0 0.0
    %868 = vmatprep.subr.mxu0 0.0
    %869 = vmatpush1.msra.mxu0 0.0
    %870 = vmatprep.subr.mxu0 0.0
    %871 = vmatpush1.msra.mxu0 0.0
    %872 = vmatprep.subr.mxu0 0.0
    %873 = vmatpush1.msra.mxu0 0.0
    %874 = vmatprep.subr.mxu0 0.0
    %875 = vmatpush1.msra.mxu0 0.0
    %876 = vmatprep.subr.mxu0 0.0
    %877 = vmatpush1.msra.mxu0 0.0
    %878 = vmatprep.subr.mxu0 0.0
    %879 = vmatpush1.msra.mxu0 0.0
    %880 = vmatprep.subr.mxu0 0.0
    %881 = vmatpush1.msra.mxu0 0.0
    %882 = vmatprep.subr.mxu0 0.0
    %883 = vmatpush1.msra.mxu0 0.0
    %884 = vmatprep.subr.mxu0 0.0
    %885 = vmatpush1.msra.mxu0 0.0
    %886 = vmatprep.subr.mxu0 0.0
    %887 = vmatpush1.msra.mxu0 0.0
    %888 = vmatprep.subr.mxu0 0.0
    %889 = vmatpush1.msra.mxu0 0.0
    %890 = vmatprep.subr.mxu0 0.0
    %891 = vmatpush1.msra.mxu0 0.0
    %892 = vmatprep.subr.mxu0 0.0
    %893 = vmatpush1.msra.mxu0 0.0
    %894 = vmatprep.subr.mxu0 0.0
    %895 = vmatpush1.msra.mxu0 %v821
    %896 = vmatprep.subr.mxu0 0.0
    %897 = vmatpush2.msra.mxu0 0.0
    %898 = vmatprep.subr.mxu0 0.0
    %899 = vmatpush2.msra.mxu0 0.0
    %900 = vmatprep.subr.mxu0 0.0
    %901 = vmatpush2.msra.mxu0 0.0
    %902 = vmatprep.subr.mxu0 0.0
    %903 = vmatpush2.msra.mxu0 0.0
    %904 = vmatprep.subr.mxu0 0.0
    %905 = vmatpush2.msra.mxu0 0.0
    %906 = vmatprep.subr.mxu0 0.0
    %907 = vmatpush2.msra.mxu0 0.0
    %908 = vmatprep.subr.mxu0 0.0
    %909 = vmatpush2.msra.mxu0 0.0
    %910 = vmatprep.subr.mxu0 0.0
    %911 = vmatpush2.msra.mxu0 0.0
    %912 = vmatprep.subr.mxu0 0.0
    %913 = vmatpush2.msra.mxu0 0.0
    %914 = vmatprep.subr.mxu0 0.0
    %915 = vmatpush2.msra.mxu0 0.0
    %916 = vmatprep.subr.mxu0 0.0
    %917 = vmatpush2.msra.mxu0 0.0
    %918 = vmatprep.subr.mxu0 0.0
    %919 = vmatpush2.msra.mxu0 0.0
    %920 = vmatprep.subr.mxu0 0.0
    %921 = vmatpush2.msra.mxu0 0.0
    %922 = vmatprep.subr.mxu0 0.0
    %923 = vmatpush2.msra.mxu0 0.0
    %924 = vmatprep.subr.mxu0 0.0
    %925 = vmatpush2.msra.mxu0 0.0
    %926 = vmatprep.subr.mxu0 0.0
    %927 = vmatpush2.msra.mxu0 0.0
    %928 = vmatprep.mubr.f32.mxu0 0.0
    %929 = vmatmul.mubr.f32.gmra.mxu0 %v853
    %v930 = vpop.f32.mrf.mxu0
    %v931 = vadd.f32 %v835, %v930
    %v932 = vpop.f32.mrf.mxu0
    %933 = vmatprep.mubr.f32.mxu0 0.0
    %934 = vmatmul.mubr.f32.gmra.mxu0 %v856
    %v935 = vpop.f32.mrf.mxu0
    %v936 = vadd.f32 %v840, %v935
    %v937 = vpop.f32.mrf.mxu0
    %938 = vmatprep.mubr.f32.mxu0 0.0
    %939 = vmatmul.mubr.f32.gmra.mxu0 %v859
    %v940 = vpop.f32.mrf.mxu0
    %v941 = vadd.f32 %v845, %v940
    %v942 = vpop.f32.mrf.mxu0
    %943 = vmatprep.mubr.f32.mxu0 0.0
    %944 = vmatmul.mubr.f32.gmra.mxu0 %v862
    %v945 = vpop.f32.mrf.mxu0
    %v946 = vadd.f32 %v850, %v945
    %v947 = vpop.f32.mrf.mxu0
    %948 = vdwg.mxu0
    %v949 = vadd.f32 %v694, %v931
    %v950 = vadd.f32 %v695, %v936
    %v951 = vadd.f32 %v696, %v941
    %v952 = vadd.f32 %v697, %v946
    %vm953 = vcmp.ge.f32.partialorder %v949, 0.0
    %vm954 = vcmp.ge.f32.partialorder %v950, 0.0
    %vm955 = vcmp.ge.f32.partialorder %v951, 0.0
    %vm956 = vcmp.ge.f32.partialorder %v952, 0.0
    %v957 = vmul.f32 %v949, 0.04
    %v958 = vmul.f32 %v950, 0.04
    %v959 = vmul.f32 %v951, 0.04
    %v960 = vmul.f32 %v952, 0.04
    %v961 = vsel %vm953, %v949, %v957
    %v962 = vsel %vm954, %v950, %v958
    %v963 = vsel %vm955, %v951, %v959
    %v964 = vsel %vm956, %v952, %v960
    %v965 = vld [vmem:[%s8] sm:$0x7f]
    %v967 = vsel %vm460, %v965, 0
    %969 = vmatprep.subr.mxu0 0.0
    %970 = vmatpush1.msra.mxu0 0.0
    %971 = vmatprep.subr.mxu0 0.0
    %972 = vmatpush1.msra.mxu0 0.0
    %973 = vmatprep.subr.mxu0 0.0
    %974 = vmatpush1.msra.mxu0 0.0
    %975 = vmatprep.subr.mxu0 0.0
    %976 = vmatpush1.msra.mxu0 0.0
    %977 = vmatprep.subr.mxu0 0.0
    %978 = vmatpush1.msra.mxu0 0.0
    %979 = vmatprep.subr.mxu0 0.0
    %980 = vmatpush1.msra.mxu0 0.0
    %981 = vmatprep.subr.mxu0 0.0
    %982 = vmatpush1.msra.mxu0 0.0
    %983 = vmatprep.subr.mxu0 0.0
    %984 = vmatpush1.msra.mxu0 0.0
    %985 = vmatprep.subr.mxu0 0.0
    %986 = vmatpush1.msra.mxu0 0.0
    %987 = vmatprep.subr.mxu0 0.0
    %988 = vmatpush1.msra.mxu0 0.0
    %989 = vmatprep.subr.mxu0 0.0
    %990 = vmatpush1.msra.mxu0 0.0
    %991 = vmatprep.subr.mxu0 0.0
    %992 = vmatpush1.msra.mxu0 0.0
    %993 = vmatprep.subr.mxu0 0.0
    %994 = vmatpush1.msra.mxu0 %v964
    %995 = vmatprep.subr.mxu0 0.0
    %996 = vmatpush1.msra.mxu0 %v963
    %997 = vmatprep.subr.mxu0 0.0
    %998 = vmatpush1.msra.mxu0 %v962
    %999 = vmatprep.subr.mxu0 0.0
    %1000 = vmatpush1.msra.mxu0 %v961
    %1001 = vmatprep.subr.mxu0 0.0
    %1002 = vmatpush2.msra.mxu0 0.0
    %1003 = vmatprep.subr.mxu0 0.0
    %1004 = vmatpush2.msra.mxu0 0.0
    %1005 = vmatprep.subr.mxu0 0.0
    %1006 = vmatpush2.msra.mxu0 0.0
    %1007 = vmatprep.subr.mxu0 0.0
    %1008 = vmatpush2.msra.mxu0 0.0
    %1009 = vmatprep.subr.mxu0 0.0
    %1010 = vmatpush2.msra.mxu0 0.0
    %1011 = vmatprep.subr.mxu0 0.0
    %1012 = vmatpush2.msra.mxu0 0.0
    %1013 = vmatprep.subr.mxu0 0.0
    %1014 = vmatpush2.msra.mxu0 0.0
    %1015 = vmatprep.subr.mxu0 0.0
    %1016 = vmatpush2.msra.mxu0 0.0
    %1017 = vmatprep.subr.mxu0 0.0
    %1018 = vmatpush2.msra.mxu0 0.0
    %1019 = vmatprep.subr.mxu0 0.0
    %1020 = vmatpush2.msra.mxu0 0.0
    %1021 = vmatprep.subr.mxu0 0.0
    %1022 = vmatpush2.msra.mxu0 0.0
    %1023 = vmatprep.subr.mxu0 0.0
    %1024 = vmatpush2.msra.mxu0 0.0
    %1025 = vmatprep.subr.mxu0 0.0
    %1026 = vmatpush2.msra.mxu0 0.0
    %1027 = vmatprep.subr.mxu0 0.0
    %1028 = vmatpush2.msra.mxu0 0.0
    %1029 = vmatprep.subr.mxu0 0.0
    %1030 = vmatpush2.msra.mxu0 0.0
    %1031 = vmatprep.subr.mxu0 0.0
    %1032 = vmatpush2.msra.mxu0 0.0
    %1033 = vmatprep.mubr.f32.mxu0 0.0
    %1034 = vmatmul.mubr.f32.gmra.mxu0 %v967
    %v1035 = vpop.f32.mrf.mxu0
    %v1036 = vadd.f32 0.0, %v1035
    %v1037 = vpop.f32.mrf.mxu0
    %1038 = vdwg.mxu0
    %s1039 = sld [smem:[#allocation2]]
    %s1040 = sld [smem:[#allocation2 + $0x1]]
    %s1041 = sld [smem:[#allocation2 + $0x2]]
    %1042 = vrot.lane.b32.xlu0 %v1036, 2
    %v1043 = vpop.permute.xlu0 %1042
    %v1044 = vmul.f32 %v1043, %v65
    %v1045 = vstv %s1039
    %v1046 = vadd.f32 %v1045, %v1044
    %v1048 = vrot.slane %v1036, 1
    %1050 = vrot.lane.b32.xlu0 %v1048, 1
    %v1051 = vpop.permute.xlu0 %1050
    %v1052 = vmul.f32 %v1051, %v62
    %v1053 = vadd.f32 %v1046, %v1052
    %v1054 = vrot.slane %v1036, 2
    %v1056 = vadd.f32 %v1053, %v1054
    %v1057 = vrot.slane %v1036, 3
    %1059 = vrot.lane.b32.xlu0 %v1057, 127
    %v1060 = vpop.permute.xlu0 %1059
    %v1061 = vmul.f32 %v1060, %v68
    %v1062 = vadd.f32 %v1056, %v1061
    %v1063 = vrot.slane %v1036, 4
    %1065 = vrot.lane.b32.xlu0 %v1063, 126
    %v1066 = vpop.permute.xlu0 %1065
    %v1067 = vmul.f32 %v1066, %v71
    %v1068 = vadd.f32 %v1062, %v1067
    %v1069 = vstv %s1040
    %v1070 = vadd.f32 %v1036, %v1069
    %v1071 = vmul.f32 %v74, %v1070
    %v1073 = vrot.slane %v1071, 5
    %v1075 = vsub.f32 %v1068, %v1073
    %v1076 = vstv %s1041
    %v1077 = vadd.f32 %v1036, %v1076
    %v1078 = vmul.f32 %v77, %v1077
    %v1080 = vrot.slane %v1078, 6
    %v1082 = vsub.f32 %v1075, %v1080
    %v1083 = vtanh.pop %v1082
    %1084 = vst [vmem:[#allocation5] sm:$0x1] %v1083
    // Predicated region
    $region42: #{tpu_custom_call.1} parent=1 // pred_check
      _
    $region43: #{tpu_custom_call.1} parent=1 // pred_check_branch
      %1086 = sbr.rel (0) target = $region45
    $region44: #{tpu_custom_call.1} parent=1 // pred_region
      %s1088 = ssub.s32 16, 16
      %1089 = vsyncadd [#allocation3], %s1088
      %s1091 = sshll.u32 [#allocation5], 4
      %s1092 = int_to_ptr.vmem [resolvable:$true] %s1091
      %1094 = dma.vmem_to_hbm [thread:$0]  %s1092, 16, %s9, [#allocation3]
    $region45: #{tpu_custom_call.1} parent=1 // pred_fallthru
      _
    // Predicated region
    $region46: #{tpu_custom_call.1} parent=1 // pred_check
      _
    $region47: #{tpu_custom_call.1} parent=1 // pred_check_branch
      %1096 = sbr.rel (0) target = $region49
    $region48: #{tpu_custom_call.1} parent=1 // pred_region
      %1097 = dma.done [#allocation3], 16
    $region49: #{tpu_custom_call.1} parent=1 // pred_fallthru
      _
    %1098 = vsyncpa [#allocation3], 1
    %1099 = vsyncpa [#allocation4], 1

</llo_original>
